<compile_context>
chip_gen: v7x
topology: tpu7x:2x2x1
jax: 0.10.0
libtpu: 0.0.40
codegen_flags: <defaults>
</compile_context>

<pallas_src>
import jax
import jax.numpy as jnp
from jax.experimental import pallas as pl
from jax.experimental.pallas import tpu as pltpu


def _mlp_kernel(xi_ref, xt_ref, w1i_ref, w1t_ref, b1_ref,
                w2_ref, b2_ref, w3_ref, b3_ref, o_ref):
    # Layer 1: split-K matmul (image K = 3*S*S is 128-aligned, text K is small).
    h1 = (jnp.dot(xi_ref[...], w1i_ref[...], preferred_element_type=jnp.float32)
          + jnp.dot(xt_ref[...], w1t_ref[...], preferred_element_type=jnp.float32)
          + b1_ref[...])
    h1 = jnp.where(h1 > 0, h1, 0.2 * h1)                  # LeakyReLU(0.2), f32 VPU

    # Layer 2: bf16 MXU matmul, f32 accumulate.
    h2 = jnp.dot(h1.astype(w2_ref.dtype), w2_ref[...],
                 preferred_element_type=jnp.float32) + b2_ref[...]
    h2 = jnp.where(h2 > 0, h2, 0.2 * h2)                  # LeakyReLU(0.2)

    # Layer 3 (256 -> 1): lane reduction on VPU/XLU instead of a 1-column matmul.
    w3 = w3_ref[...].astype(jnp.float32)                  # (1, 256)
    h3 = jnp.sum(h2 * w3, axis=-1, keepdims=True) + b3_ref[...]   # (TM, 1)

    sig = jax.nn.sigmoid(h3)                              # f32 on EUP
    # Lane-dense (unmasked) store into a 128-wide padded output slab.
    o_ref[...] = jnp.broadcast_to(sig, o_ref.shape).astype(o_ref.dtype)


def stage1_discriminator_forward(image, text_embedding, params):
    """image: (B, 3, S, S) NCHW float; text_embedding: (B, T). Returns (B, 1) f32."""
    B = image.shape[0]
    d_img = image.shape[1] * image.shape[2] * image.shape[3]   # 3*S*S
    t_dim = text_embedding.shape[1]

    # bf16 inputs / weights (memory-bound kernel); math stays f32 in-kernel.
    xi = image.reshape(B, d_img).astype(jnp.bfloat16)
    xt = text_embedding.astype(jnp.bfloat16)

    w1 = params["w1"].astype(jnp.bfloat16)
    w1i = w1[:d_img]                                      # (3*S*S, 512), 128-aligned K
    w1t = w1[d_img:]                                      # (T, 512)
    b1 = params["b1"].astype(jnp.float32)                 # (1, 512)
    w2 = params["w2"].astype(jnp.bfloat16)                # (512, 256)
    b2 = params["b2"].astype(jnp.float32)                 # (1, 256)
    w3 = params["w3"].reshape(1, -1).astype(jnp.bfloat16) # (1, 256) row vector
    b3 = params["b3"].reshape(1, 1).astype(jnp.float32)   # (1, 1)

    tm = min(128, max(8, ((B + 7) // 8) * 8))             # batch tile (sublane multiple)
    grid = (pl.cdiv(B, tm),)
    out_lanes = 128                                       # lane-dense padded output

    # VMEM budget: double-buffered blocks + f32 intermediates, clamped for v7x (64 MiB).
    blk_bytes = (tm * d_img * 2 + tm * t_dim * 2
                 + d_img * 512 * 2 + t_dim * 512 * 2 + 512 * 4
                 + 512 * 256 * 2 + 256 * 4 + 256 * 2 + 4
                 + tm * out_lanes * 4)
    inter_bytes = tm * (512 + 512 + 256 + 256 + out_lanes) * 4
    vmem_limit = int(min(32 * 2**20, max(16 * 2**20, 2 * (2 * blk_bytes + inter_bytes))))

    flops = 2 * B * (d_img * 512 + t_dim * 512 + 512 * 256 + 256)
    bytes_accessed = ((xi.size + xt.size + w1.size + w2.size + w3.size) * 2
                      + (b1.size + b2.size + b3.size) * 4
                      + B * out_lanes * 4)

    out = pl.pallas_call(
        _mlp_kernel,
        out_shape=jax.ShapeDtypeStruct((B, out_lanes), jnp.float32),
        grid=grid,
        in_specs=[
            pl.BlockSpec((tm, d_img), lambda i: (i, 0)),    # image part of x
            pl.BlockSpec((tm, t_dim), lambda i: (i, 0)),    # text part of x
            pl.BlockSpec((d_img, 512), lambda i: (0, 0)),   # w1 image rows (VMEM-resident)
            pl.BlockSpec((t_dim, 512), lambda i: (0, 0)),   # w1 text rows
            pl.BlockSpec((1, 512), lambda i: (0, 0)),       # b1
            pl.BlockSpec((512, 256), lambda i: (0, 0)),     # w2
            pl.BlockSpec((1, 256), lambda i: (0, 0)),       # b2
            pl.BlockSpec((1, 256), lambda i: (0, 0)),       # w3 row
            pl.BlockSpec((1, 1), lambda i: (0, 0)),         # b3
        ],
        out_specs=pl.BlockSpec((tm, out_lanes), lambda i: (i, 0)),
        compiler_params=pltpu.CompilerParams(
            dimension_semantics=("parallel",),
            vmem_limit_bytes=vmem_limit),
        cost_estimate=pl.CostEstimate(
            flops=flops, transcendentals=B, bytes_accessed=int(bytes_accessed)),
    )(xi, xt, w1i, w1t, b1, w2, b2, w3, b3)

    return out[:, :1]                                      # un-pad slab -> (B, 1)


def init_params(key, text_embedding_dim, image_size):
    """Deterministic init mimicking nn.Linear shapes (stored transposed: (in, out))."""
    d_in = 3 * image_size * image_size + text_embedding_dim
    dims = [(d_in, 512), (512, 256), (256, 1)]
    params = {}
    for i, (fi, fo) in enumerate(dims, start=1):
        key, kw, kb = jax.random.split(key, 3)
        bound = 1.0 / (fi ** 0.5)
        params[f"w{i}"] = jax.random.uniform(
            kw, (fi, fo), jnp.float32, minval=-bound, maxval=bound)
        params[f"b{i}"] = jax.random.uniform(
            kb, (1, fo), jnp.float32, minval=-bound, maxval=bound)
    return params


if __name__ == "__main__":
    B = 2
    IMAGE_SIZE = 16
    TEXT_DIM = 32

    key = jax.random.PRNGKey(0)
    k_img, k_txt, k_par = jax.random.split(key, 3)

    image = jax.random.normal(k_img, (B, 3, IMAGE_SIZE, IMAGE_SIZE), jnp.float32)
    text_embedding = jax.random.normal(k_txt, (B, TEXT_DIM), jnp.float32)
    params = init_params(k_par, TEXT_DIM, IMAGE_SIZE)

    fwd = jax.jit(stage1_discriminator_forward)
    out = fwd(image, text_embedding, params)
    out = jax.block_until_ready(out)

    assert out.shape == (B, 1)
    assert bool(jnp.all((out >= 0.0) & (out <= 1.0)))
    assert bool(jnp.all(jnp.isfinite(out)))
    print("KERNEL_OK")
</pallas_src>

<mosaic_0001>
module attributes {stable_mosaic.version = 11 : i64} {
  func.func @_mlp_kernel(%arg0: i32, %arg1: memref<8x768xbf16, #tpu.memory_space<vmem>>, %arg2: memref<8x32xbf16, #tpu.memory_space<vmem>>, %arg3: memref<768x512xbf16, #tpu.memory_space<vmem>>, %arg4: memref<32x512xbf16, #tpu.memory_space<vmem>>, %arg5: memref<1x512xf32, #tpu.memory_space<vmem>>, %arg6: memref<512x256xbf16, #tpu.memory_space<vmem>>, %arg7: memref<1x256xf32, #tpu.memory_space<vmem>>, %arg8: memref<1x256xbf16, #tpu.memory_space<vmem>>, %arg9: memref<1x1xf32, #tpu.memory_space<vmem>>, %arg10: memref<8x128xf32, #tpu.memory_space<vmem>>) attributes {dimension_semantics = [#tpu.dimension_semantics<parallel>], iteration_bounds = array<i64: 1>, scalar_prefetch = 0 : i64, scratch_operands = 0 : i64, tpu.core_type = #tpu.core_type<tc>, window_params = [{transform_indices = @transform_0, window_bounds = array<i64: 8, 768>}, {transform_indices = @transform_1, window_bounds = array<i64: 8, 32>}, {pipeline_mode = #tpu.pipeline_mode<synchronous>, transform_indices = @transform_2, window_bounds = array<i64: 768, 512>}, {pipeline_mode = #tpu.pipeline_mode<synchronous>, transform_indices = @transform_3, window_bounds = array<i64: 32, 512>}, {pipeline_mode = #tpu.pipeline_mode<synchronous>, transform_indices = @transform_4, window_bounds = array<i64: 1, 512>}, {pipeline_mode = #tpu.pipeline_mode<synchronous>, transform_indices = @transform_5, window_bounds = array<i64: 512, 256>}, {pipeline_mode = #tpu.pipeline_mode<synchronous>, transform_indices = @transform_6, window_bounds = array<i64: 1, 256>}, {pipeline_mode = #tpu.pipeline_mode<synchronous>, transform_indices = @transform_7, window_bounds = array<i64: 1, 256>}, {pipeline_mode = #tpu.pipeline_mode<synchronous>, transform_indices = @transform_8, window_bounds = array<i64: 1, 1>}, {transform_indices = @transform_9, window_bounds = array<i64: 8, 128>}]} {
    %c0 = arith.constant 0 : index
    %c0_0 = arith.constant 0 : index
    %0 = vector.load %arg1[%c0, %c0_0] : memref<8x768xbf16, #tpu.memory_space<vmem>>, vector<8x768xbf16>
    %c0_1 = arith.constant 0 : index
    %c0_2 = arith.constant 0 : index
    %1 = vector.load %arg3[%c0_1, %c0_2] : memref<768x512xbf16, #tpu.memory_space<vmem>>, vector<768x512xbf16>
    %cst = arith.constant dense<0.000000e+00> : vector<8x512xf32>
    %2 = tpu.matmul %0, %1, %cst {dimension_numbers = #tpu.dot_dimension_numbers<[1], [0], [0], [1], [0, 0, 1, 1], [], []>} : vector<8x768xbf16>, vector<768x512xbf16>, vector<8x512xf32> -> vector<8x512xf32>
    %c0_3 = arith.constant 0 : index
    %c0_4 = arith.constant 0 : index
    %3 = vector.load %arg2[%c0_3, %c0_4] : memref<8x32xbf16, #tpu.memory_space<vmem>>, vector<8x32xbf16>
    %c0_5 = arith.constant 0 : index
    %c0_6 = arith.constant 0 : index
    %4 = vector.load %arg4[%c0_5, %c0_6] : memref<32x512xbf16, #tpu.memory_space<vmem>>, vector<32x512xbf16>
    %cst_7 = arith.constant dense<0.000000e+00> : vector<8x512xf32>
    %5 = tpu.matmul %3, %4, %cst_7 {dimension_numbers = #tpu.dot_dimension_numbers<[1], [0], [0], [1], [0, 0, 1, 1], [], []>} : vector<8x32xbf16>, vector<32x512xbf16>, vector<8x512xf32> -> vector<8x512xf32>
    %6 = arith.addf %2, %5 : vector<8x512xf32>
    %c0_8 = arith.constant 0 : index
    %c0_9 = arith.constant 0 : index
    %7 = vector.load %arg5[%c0_8, %c0_9] : memref<1x512xf32, #tpu.memory_space<vmem>>, vector<1x512xf32>
    %8 = vector.broadcast %7 : vector<1x512xf32> to vector<8x512xf32>
    %9 = arith.addf %6, %8 : vector<8x512xf32>
    %cst_10 = arith.constant 0.000000e+00 : f32
    %10 = vector.broadcast %cst_10 : f32 to vector<8x512xf32>
    %11 = arith.cmpf ogt, %9, %10 : vector<8x512xf32>
    %cst_11 = arith.constant 2.000000e-01 : f32
    %12 = vector.broadcast %cst_11 : f32 to vector<8x512xf32>
    %13 = arith.mulf %12, %9 : vector<8x512xf32>
    %14 = arith.select %11, %9, %13 : vector<8x512xi1>, vector<8x512xf32>
    %15 = arith.truncf %14 : vector<8x512xf32> to vector<8x512xbf16>
    %c0_12 = arith.constant 0 : index
    %c0_13 = arith.constant 0 : index
    %16 = vector.load %arg6[%c0_12, %c0_13] : memref<512x256xbf16, #tpu.memory_space<vmem>>, vector<512x256xbf16>
    %cst_14 = arith.constant dense<0.000000e+00> : vector<8x256xf32>
    %17 = tpu.matmul %15, %16, %cst_14 {dimension_numbers = #tpu.dot_dimension_numbers<[1], [0], [0], [1], [0, 0, 1, 1], [], []>} : vector<8x512xbf16>, vector<512x256xbf16>, vector<8x256xf32> -> vector<8x256xf32>
    %c0_15 = arith.constant 0 : index
    %c0_16 = arith.constant 0 : index
    %18 = vector.load %arg7[%c0_15, %c0_16] : memref<1x256xf32, #tpu.memory_space<vmem>>, vector<1x256xf32>
    %19 = vector.broadcast %18 : vector<1x256xf32> to vector<8x256xf32>
    %20 = arith.addf %17, %19 : vector<8x256xf32>
    %cst_17 = arith.constant 0.000000e+00 : f32
    %21 = vector.broadcast %cst_17 : f32 to vector<8x256xf32>
    %22 = arith.cmpf ogt, %20, %21 : vector<8x256xf32>
    %cst_18 = arith.constant 2.000000e-01 : f32
    %23 = vector.broadcast %cst_18 : f32 to vector<8x256xf32>
    %24 = arith.mulf %23, %20 : vector<8x256xf32>
    %25 = arith.select %22, %20, %24 : vector<8x256xi1>, vector<8x256xf32>
    %c0_19 = arith.constant 0 : index
    %c0_20 = arith.constant 0 : index
    %26 = vector.load %arg8[%c0_19, %c0_20] : memref<1x256xbf16, #tpu.memory_space<vmem>>, vector<1x256xbf16>
    %27 = arith.extf %26 : vector<1x256xbf16> to vector<1x256xf32>
    %28 = vector.broadcast %27 : vector<1x256xf32> to vector<8x256xf32>
    %29 = arith.mulf %25, %28 : vector<8x256xf32>
    %cst_21 = arith.constant dense<0.000000e+00> : vector<8xf32>
    %30 = vector.multi_reduction <add>, %29, %cst_21 [1] : vector<8x256xf32> to vector<8xf32>
    %31 = vector.shape_cast %30 : vector<8xf32> to vector<8x1xf32>
    %c0_22 = arith.constant 0 : index
    %c0_23 = arith.constant 0 : index
    %32 = vector.load %arg9[%c0_22, %c0_23] : memref<1x1xf32, #tpu.memory_space<vmem>>, vector<1x1xf32>
    %33 = vector.broadcast %32 : vector<1x1xf32> to vector<8x1xf32>
    %34 = arith.addf %31, %33 : vector<8x1xf32>
    %35 = arith.negf %34 : vector<8x1xf32>
    %36 = math.exp %35 : vector<8x1xf32>
    %cst_24 = arith.constant 1.000000e+00 : f32
    %37 = vector.broadcast %cst_24 : f32 to vector<8x1xf32>
    %38 = arith.addf %37, %36 : vector<8x1xf32>
    %39 = arith.divf %37, %38 : vector<8x1xf32>
    %40 = vector.shape_cast %39 : vector<8x1xf32> to vector<8x1xf32>
    %41 = vector.broadcast %40 : vector<8x1xf32> to vector<8x128xf32>
    %c0_25 = arith.constant 0 : index
    %c0_26 = arith.constant 0 : index
    %42 = vector.load %arg10[%c0_25, %c0_26] : memref<8x128xf32, #tpu.memory_space<vmem>>, vector<8x128xf32>
    tpu.vector_store %arg10[%c0_25, %c0_26], %41 {strides = array<i32>} : memref<8x128xf32, #tpu.memory_space<vmem>>, vector<8x128xf32>,
    return
  }
  func.func @transform_0(%arg0: i32) -> (i32, i32) {
    %c0_i32 = arith.constant 0 : i32
    %c0_i32_0 = arith.constant 0 : i32
    return %arg0, %c0_i32 : i32, i32
  }
  func.func @transform_1(%arg0: i32) -> (i32, i32) {
    %c0_i32 = arith.constant 0 : i32
    %c0_i32_0 = arith.constant 0 : i32
    return %arg0, %c0_i32 : i32, i32
  }
  func.func @transform_2(%arg0: i32) -> (i32, i32) {
    %c0_i32 = arith.constant 0 : i32
    %c0_i32_0 = arith.constant 0 : i32
    %c0_i32_1 = arith.constant 0 : i32
    return %c0_i32, %c0_i32_0 : i32, i32
  }
  func.func @transform_3(%arg0: i32) -> (i32, i32) {
    %c0_i32 = arith.constant 0 : i32
    %c0_i32_0 = arith.constant 0 : i32
    %c0_i32_1 = arith.constant 0 : i32
    return %c0_i32, %c0_i32_0 : i32, i32
  }
  func.func @transform_4(%arg0: i32) -> (i32, i32) {
    %c0_i32 = arith.constant 0 : i32
    %c0_i32_0 = arith.constant 0 : i32
    %c0_i32_1 = arith.constant 0 : i32
    return %c0_i32, %c0_i32_0 : i32, i32
  }
  func.func @transform_5(%arg0: i32) -> (i32, i32) {
    %c0_i32 = arith.constant 0 : i32
    %c0_i32_0 = arith.constant 0 : i32
    %c0_i32_1 = arith.constant 0 : i32
    return %c0_i32, %c0_i32_0 : i32, i32
  }
  func.func @transform_6(%arg0: i32) -> (i32, i32) {
    %c0_i32 = arith.constant 0 : i32
    %c0_i32_0 = arith.constant 0 : i32
    %c0_i32_1 = arith.constant 0 : i32
    return %c0_i32, %c0_i32_0 : i32, i32
  }
  func.func @transform_7(%arg0: i32) -> (i32, i32) {
    %c0_i32 = arith.constant 0 : i32
    %c0_i32_0 = arith.constant 0 : i32
    %c0_i32_1 = arith.constant 0 : i32
    return %c0_i32, %c0_i32_0 : i32, i32
  }
  func.func @transform_8(%arg0: i32) -> (i32, i32) {
    %c0_i32 = arith.constant 0 : i32
    %c0_i32_0 = arith.constant 0 : i32
    %c0_i32_1 = arith.constant 0 : i32
    return %c0_i32, %c0_i32_0 : i32, i32
  }
  func.func @transform_9(%arg0: i32) -> (i32, i32) {
    %c0_i32 = arith.constant 0 : i32
    %c0_i32_0 = arith.constant 0 : i32
    return %arg0, %c0_i32 : i32, i32
  }
}

</mosaic_0001>

<llo_original>
// kernel: stage1_discriminator_forward.1
$region0: #{stage1_discriminator_forward.1}
  #allocation0 [shape = 'u32[]', space=smem, size = 0x4, offset = 0x4, fixed_abs, tag = 'smem constant byte address 0x4 - core index']
  #allocation1 [shape = 'u32[144,128]{1,0:T(1,128)}', space=vmem, size = 0x12000, scoped, tag = 'internal scratch']
  #allocation2 [shape = 'f32[1,1]{1,0:T(1,128)S(1)}', space=vmem, size = 0x200, scoped, tag = 'scoped memory for stage1_discriminator_forward.1']
  %s0 = inlined_call_operand.vmem [shape: bf16[2,768], index: 0, kind: input, shape index: {}]
  %s1 = inlined_call_operand.vmem [shape: bf16[2,32], index: 1, kind: input, shape index: {}]
  %s2 = inlined_call_operand.vmem [shape: bf16[768,512], index: 2, kind: input, shape index: {}]
  %s3 = inlined_call_operand.vmem [shape: bf16[32,512], index: 3, kind: input, shape index: {}]
  %s4 = inlined_call_operand.vmem [shape: f32[1,512], index: 4, kind: input, shape index: {}]
  %s5 = inlined_call_operand.vmem [shape: bf16[512,256], index: 5, kind: input, shape index: {}]
  %s6 = inlined_call_operand.vmem [shape: f32[1,256], index: 6, kind: input, shape index: {}]
  %s7 = inlined_call_operand.vmem [shape: bf16[1,256], index: 7, kind: input, shape index: {}]
  %s8 = inlined_call_operand.<no memory space> [shape: f32[1,1], index: 8, kind: input, shape index: {}]
  %s9 = inlined_call_operand.vmem [shape: f32[2,128], index: 9, kind: output, shape index: {}]
  %s10 = sld [smem:[#allocation0]]
  $region76: #{stage1_discriminator_forward.1} parent=0
    _
  %s12 = ssub.s32 1, %s10
  %s13 = scalar_select 0, %s12, %s10
  %v14 = vstv %s8
  %15 = vst [vmem:[#allocation2] sm:$0x1] %v14
  $region1: #{stage1_discriminator_forward.1} parent=0
    #allocation3 [shape = 'u8[4096]{0}', space=vmem, size = 0x1000, scoped, tag = 'output window, operand 0, single buffered']
    // Predicated region
    $region2: #{stage1_discriminator_forward.1} parent=1 // pred_check
      _
    $region3: #{stage1_discriminator_forward.1} parent=1 // pred_check_branch
      %17 = sbr.rel (0) target = $region5
    $region4: #{stage1_discriminator_forward.1} parent=1 // pred_region
      _
    $region5: #{stage1_discriminator_forward.1} parent=1 // pred_fallthru
      _
    // Predicated region
    $region6: #{stage1_discriminator_forward.1} parent=1 // pred_check
      _
    $region7: #{stage1_discriminator_forward.1} parent=1 // pred_check_branch
      %19 = sbr.rel (0) target = $region9
    $region8: #{stage1_discriminator_forward.1} parent=1 // pred_region
      _
    $region9: #{stage1_discriminator_forward.1} parent=1 // pred_fallthru
      _
    // Predicated region
    $region10: #{stage1_discriminator_forward.1} parent=1 // pred_check
      _
    $region11: #{stage1_discriminator_forward.1} parent=1 // pred_check_branch
      %21 = sbr.rel (0) target = $region13
    $region12: #{stage1_discriminator_forward.1} parent=1 // pred_region
      _
    $region13: #{stage1_discriminator_forward.1} parent=1 // pred_fallthru
      _
    // Predicated region
    $region14: #{stage1_discriminator_forward.1} parent=1 // pred_check
      _
    $region15: #{stage1_discriminator_forward.1} parent=1 // pred_check_branch
      %23 = sbr.rel (0) target = $region17
    $region16: #{stage1_discriminator_forward.1} parent=1 // pred_region
      _
    $region17: #{stage1_discriminator_forward.1} parent=1 // pred_fallthru
      _
    // Predicated region
    $region18: #{stage1_discriminator_forward.1} parent=1 // pred_check
      _
    $region19: #{stage1_discriminator_forward.1} parent=1 // pred_check_branch
      %25 = sbr.rel (0) target = $region21
    $region20: #{stage1_discriminator_forward.1} parent=1 // pred_region
      _
    $region21: #{stage1_discriminator_forward.1} parent=1 // pred_fallthru
      _
    // Predicated region
    $region22: #{stage1_discriminator_forward.1} parent=1 // pred_check
      _
    $region23: #{stage1_discriminator_forward.1} parent=1 // pred_check_branch
      %27 = sbr.rel (0) target = $region25
    $region24: #{stage1_discriminator_forward.1} parent=1 // pred_region
      _
    $region25: #{stage1_discriminator_forward.1} parent=1 // pred_fallthru
      _
    // Predicated region
    $region26: #{stage1_discriminator_forward.1} parent=1 // pred_check
      _
    $region27: #{stage1_discriminator_forward.1} parent=1 // pred_check_branch
      %29 = sbr.rel (0) target = $region29
    $region28: #{stage1_discriminator_forward.1} parent=1 // pred_region
      _
    $region29: #{stage1_discriminator_forward.1} parent=1 // pred_fallthru
      _
    // Predicated region
    $region30: #{stage1_discriminator_forward.1} parent=1 // pred_check
      _
    $region31: #{stage1_discriminator_forward.1} parent=1 // pred_check_branch
      %31 = sbr.rel (0) target = $region33
    $region32: #{stage1_discriminator_forward.1} parent=1 // pred_region
      _
    $region33: #{stage1_discriminator_forward.1} parent=1 // pred_fallthru
      _
    // Predicated region
    $region34: #{stage1_discriminator_forward.1} parent=1 // pred_check
      _
    $region35: #{stage1_discriminator_forward.1} parent=1 // pred_check_branch
      %33 = sbr.rel (0) target = $region37
    $region36: #{stage1_discriminator_forward.1} parent=1 // pred_region
      _
    $region37: #{stage1_discriminator_forward.1} parent=1 // pred_fallthru
      _
    %v35 = vld [vmem:[%s0] sm:$0x3f]
    %v36 = vld [vmem:[%s0 + $0x6] sm:$0x3f]
    %v37 = vld [vmem:[%s0 + $0xc] sm:$0x3f]
    %v38 = vld [vmem:[%s0 + $0x12] sm:$0x3f]
    %v39 = vld [vmem:[%s2] sm:$0xff]
    %v40 = vld [vmem:[%s2 + $0x8] sm:$0xff]
    %v41 = vld [vmem:[%s2 + $0x10] sm:$0xff]
    %v42 = vld [vmem:[%s2 + $0x18] sm:$0xff]
    %v43 = vld [vmem:[%s2 + $0x20] sm:$0xff]
    %v44 = vld [vmem:[%s2 + $0x28] sm:$0xff]
    %v45 = vld [vmem:[%s2 + $0x30] sm:$0xff]
    %v46 = vld [vmem:[%s2 + $0x38] sm:$0xff]
    %v47 = vld [vmem:[%s2 + $0x40] sm:$0xff]
    %v48 = vld [vmem:[%s2 + $0x48] sm:$0xff]
    %v49 = vld [vmem:[%s2 + $0x50] sm:$0xff]
    %v50 = vld [vmem:[%s2 + $0x58] sm:$0xff]
    %v51 = vld [vmem:[%s2 + $0x60] sm:$0xff]
    %v52 = vld [vmem:[%s2 + $0x68] sm:$0xff]
    %v53 = vld [vmem:[%s2 + $0x70] sm:$0xff]
    %v54 = vld [vmem:[%s2 + $0x78] sm:$0xff]
    %v55 = vld [vmem:[%s2 + $0x80] sm:$0xff]
    %v56 = vld [vmem:[%s2 + $0x88] sm:$0xff]
    %v57 = vld [vmem:[%s2 + $0x90] sm:$0xff]
    %v58 = vld [vmem:[%s2 + $0x98] sm:$0xff]
    %v59 = vld [vmem:[%s2 + $0xa0] sm:$0xff]
    %v60 = vld [vmem:[%s2 + $0xa8] sm:$0xff]
    %v61 = vld [vmem:[%s2 + $0xb0] sm:$0xff]
    %v62 = vld [vmem:[%s2 + $0xb8] sm:$0xff]
    %v63 = vld [vmem:[%s2 + $0xc0] sm:$0xff]
    %v64 = vld [vmem:[%s2 + $0xc8] sm:$0xff]
    %v65 = vld [vmem:[%s2 + $0xd0] sm:$0xff]
    %v66 = vld [vmem:[%s2 + $0xd8] sm:$0xff]
    %v67 = vld [vmem:[%s2 + $0xe0] sm:$0xff]
    %v68 = vld [vmem:[%s2 + $0xe8] sm:$0xff]
    %v69 = vld [vmem:[%s2 + $0xf0] sm:$0xff]
    %v70 = vld [vmem:[%s2 + $0xf8] sm:$0xff]
    %v71 = vld [vmem:[%s2 + $0x100] sm:$0xff]
    %v72 = vld [vmem:[%s2 + $0x108] sm:$0xff]
    %v73 = vld [vmem:[%s2 + $0x110] sm:$0xff]
    %v74 = vld [vmem:[%s2 + $0x118] sm:$0xff]
    %v75 = vld [vmem:[%s2 + $0x120] sm:$0xff]
    %v76 = vld [vmem:[%s2 + $0x128] sm:$0xff]
    %v77 = vld [vmem:[%s2 + $0x130] sm:$0xff]
    %v78 = vld [vmem:[%s2 + $0x138] sm:$0xff]
    %v79 = vld [vmem:[%s2 + $0x140] sm:$0xff]
    %v80 = vld [vmem:[%s2 + $0x148] sm:$0xff]
    %v81 = vld [vmem:[%s2 + $0x150] sm:$0xff]
    %v82 = vld [vmem:[%s2 + $0x158] sm:$0xff]
    %v83 = vld [vmem:[%s2 + $0x160] sm:$0xff]
    %v84 = vld [vmem:[%s2 + $0x168] sm:$0xff]
    %v85 = vld [vmem:[%s2 + $0x170] sm:$0xff]
    %v86 = vld [vmem:[%s2 + $0x178] sm:$0xff]
    %v87 = vld [vmem:[%s2 + $0x180] sm:$0xff]
    %v88 = vld [vmem:[%s2 + $0x188] sm:$0xff]
    %v89 = vld [vmem:[%s2 + $0x190] sm:$0xff]
    %v90 = vld [vmem:[%s2 + $0x198] sm:$0xff]
    %v91 = vld [vmem:[%s2 + $0x1a0] sm:$0xff]
    %v92 = vld [vmem:[%s2 + $0x1a8] sm:$0xff]
    %v93 = vld [vmem:[%s2 + $0x1b0] sm:$0xff]
    %v94 = vld [vmem:[%s2 + $0x1b8] sm:$0xff]
    %v95 = vld [vmem:[%s2 + $0x1c0] sm:$0xff]
    %v96 = vld [vmem:[%s2 + $0x1c8] sm:$0xff]
    %v97 = vld [vmem:[%s2 + $0x1d0] sm:$0xff]
    %v98 = vld [vmem:[%s2 + $0x1d8] sm:$0xff]
    %v99 = vld [vmem:[%s2 + $0x1e0] sm:$0xff]
    %v100 = vld [vmem:[%s2 + $0x1e8] sm:$0xff]
    %v101 = vld [vmem:[%s2 + $0x1f0] sm:$0xff]
    %v102 = vld [vmem:[%s2 + $0x1f8] sm:$0xff]
    %v103 = vld [vmem:[%s2 + $0x200] sm:$0xff]
    %v104 = vld [vmem:[%s2 + $0x208] sm:$0xff]
    %v105 = vld [vmem:[%s2 + $0x210] sm:$0xff]
    %v106 = vld [vmem:[%s2 + $0x218] sm:$0xff]
    %v107 = vld [vmem:[%s2 + $0x220] sm:$0xff]
    %v108 = vld [vmem:[%s2 + $0x228] sm:$0xff]
    %v109 = vld [vmem:[%s2 + $0x230] sm:$0xff]
    %v110 = vld [vmem:[%s2 + $0x238] sm:$0xff]
    %v111 = vld [vmem:[%s2 + $0x240] sm:$0xff]
    %v112 = vld [vmem:[%s2 + $0x248] sm:$0xff]
    %v113 = vld [vmem:[%s2 + $0x250] sm:$0xff]
    %v114 = vld [vmem:[%s2 + $0x258] sm:$0xff]
    %v115 = vld [vmem:[%s2 + $0x260] sm:$0xff]
    %v116 = vld [vmem:[%s2 + $0x268] sm:$0xff]
    %v117 = vld [vmem:[%s2 + $0x270] sm:$0xff]
    %v118 = vld [vmem:[%s2 + $0x278] sm:$0xff]
    %v119 = vld [vmem:[%s2 + $0x280] sm:$0xff]
    %v120 = vld [vmem:[%s2 + $0x288] sm:$0xff]
    %v121 = vld [vmem:[%s2 + $0x290] sm:$0xff]
    %v122 = vld [vmem:[%s2 + $0x298] sm:$0xff]
    %v123 = vld [vmem:[%s2 + $0x2a0] sm:$0xff]
    %v124 = vld [vmem:[%s2 + $0x2a8] sm:$0xff]
    %v125 = vld [vmem:[%s2 + $0x2b0] sm:$0xff]
    %v126 = vld [vmem:[%s2 + $0x2b8] sm:$0xff]
    %v127 = vld [vmem:[%s2 + $0x2c0] sm:$0xff]
    %v128 = vld [vmem:[%s2 + $0x2c8] sm:$0xff]
    %v129 = vld [vmem:[%s2 + $0x2d0] sm:$0xff]
    %v130 = vld [vmem:[%s2 + $0x2d8] sm:$0xff]
    %v131 = vld [vmem:[%s2 + $0x2e0] sm:$0xff]
    %v132 = vld [vmem:[%s2 + $0x2e8] sm:$0xff]
    %v133 = vld [vmem:[%s2 + $0x2f0] sm:$0xff]
    %v134 = vld [vmem:[%s2 + $0x2f8] sm:$0xff]
    %v135 = vld [vmem:[%s2 + $0x300] sm:$0xff]
    %v136 = vld [vmem:[%s2 + $0x308] sm:$0xff]
    %v137 = vld [vmem:[%s2 + $0x310] sm:$0xff]
    %v138 = vld [vmem:[%s2 + $0x318] sm:$0xff]
    %v139 = vld [vmem:[%s2 + $0x320] sm:$0xff]
    %v140 = vld [vmem:[%s2 + $0x328] sm:$0xff]
    %v141 = vld [vmem:[%s2 + $0x330] sm:$0xff]
    %v142 = vld [vmem:[%s2 + $0x338] sm:$0xff]
    %v143 = vld [vmem:[%s2 + $0x340] sm:$0xff]
    %v144 = vld [vmem:[%s2 + $0x348] sm:$0xff]
    %v145 = vld [vmem:[%s2 + $0x350] sm:$0xff]
    %v146 = vld [vmem:[%s2 + $0x358] sm:$0xff]
    %v147 = vld [vmem:[%s2 + $0x360] sm:$0xff]
    %v148 = vld [vmem:[%s2 + $0x368] sm:$0xff]
    %v149 = vld [vmem:[%s2 + $0x370] sm:$0xff]
    %v150 = vld [vmem:[%s2 + $0x378] sm:$0xff]
    %v151 = vld [vmem:[%s2 + $0x380] sm:$0xff]
    %v152 = vld [vmem:[%s2 + $0x388] sm:$0xff]
    %v153 = vld [vmem:[%s2 + $0x390] sm:$0xff]
    %v154 = vld [vmem:[%s2 + $0x398] sm:$0xff]
    %v155 = vld [vmem:[%s2 + $0x3a0] sm:$0xff]
    %v156 = vld [vmem:[%s2 + $0x3a8] sm:$0xff]
    %v157 = vld [vmem:[%s2 + $0x3b0] sm:$0xff]
    %v158 = vld [vmem:[%s2 + $0x3b8] sm:$0xff]
    %v159 = vld [vmem:[%s2 + $0x3c0] sm:$0xff]
    %v160 = vld [vmem:[%s2 + $0x3c8] sm:$0xff]
    %v161 = vld [vmem:[%s2 + $0x3d0] sm:$0xff]
    %v162 = vld [vmem:[%s2 + $0x3d8] sm:$0xff]
    %v163 = vld [vmem:[%s2 + $0x3e0] sm:$0xff]
    %v164 = vld [vmem:[%s2 + $0x3e8] sm:$0xff]
    %v165 = vld [vmem:[%s2 + $0x3f0] sm:$0xff]
    %v166 = vld [vmem:[%s2 + $0x3f8] sm:$0xff]
    %v167 = vld [vmem:[%s2 + $0x400] sm:$0xff]
    %v168 = vld [vmem:[%s2 + $0x408] sm:$0xff]
    %v169 = vld [vmem:[%s2 + $0x410] sm:$0xff]
    %v170 = vld [vmem:[%s2 + $0x418] sm:$0xff]
    %v171 = vld [vmem:[%s2 + $0x420] sm:$0xff]
    %v172 = vld [vmem:[%s2 + $0x428] sm:$0xff]
    %v173 = vld [vmem:[%s2 + $0x430] sm:$0xff]
    %v174 = vld [vmem:[%s2 + $0x438] sm:$0xff]
    %v175 = vld [vmem:[%s2 + $0x440] sm:$0xff]
    %v176 = vld [vmem:[%s2 + $0x448] sm:$0xff]
    %v177 = vld [vmem:[%s2 + $0x450] sm:$0xff]
    %v178 = vld [vmem:[%s2 + $0x458] sm:$0xff]
    %v179 = vld [vmem:[%s2 + $0x460] sm:$0xff]
    %v180 = vld [vmem:[%s2 + $0x468] sm:$0xff]
    %v181 = vld [vmem:[%s2 + $0x470] sm:$0xff]
    %v182 = vld [vmem:[%s2 + $0x478] sm:$0xff]
    %v183 = vld [vmem:[%s2 + $0x480] sm:$0xff]
    %v184 = vld [vmem:[%s2 + $0x488] sm:$0xff]
    %v185 = vld [vmem:[%s2 + $0x490] sm:$0xff]
    %v186 = vld [vmem:[%s2 + $0x498] sm:$0xff]
    %v187 = vld [vmem:[%s2 + $0x4a0] sm:$0xff]
    %v188 = vld [vmem:[%s2 + $0x4a8] sm:$0xff]
    %v189 = vld [vmem:[%s2 + $0x4b0] sm:$0xff]
    %v190 = vld [vmem:[%s2 + $0x4b8] sm:$0xff]
    %v191 = vld [vmem:[%s2 + $0x4c0] sm:$0xff]
    %v192 = vld [vmem:[%s2 + $0x4c8] sm:$0xff]
    %v193 = vld [vmem:[%s2 + $0x4d0] sm:$0xff]
    %v194 = vld [vmem:[%s2 + $0x4d8] sm:$0xff]
    %v195 = vld [vmem:[%s2 + $0x4e0] sm:$0xff]
    %v196 = vld [vmem:[%s2 + $0x4e8] sm:$0xff]
    %v197 = vld [vmem:[%s2 + $0x4f0] sm:$0xff]
    %v198 = vld [vmem:[%s2 + $0x4f8] sm:$0xff]
    %v199 = vld [vmem:[%s2 + $0x500] sm:$0xff]
    %v200 = vld [vmem:[%s2 + $0x508] sm:$0xff]
    %v201 = vld [vmem:[%s2 + $0x510] sm:$0xff]
    %v202 = vld [vmem:[%s2 + $0x518] sm:$0xff]
    %v203 = vld [vmem:[%s2 + $0x520] sm:$0xff]
    %v204 = vld [vmem:[%s2 + $0x528] sm:$0xff]
    %v205 = vld [vmem:[%s2 + $0x530] sm:$0xff]
    %v206 = vld [vmem:[%s2 + $0x538] sm:$0xff]
    %v207 = vld [vmem:[%s2 + $0x540] sm:$0xff]
    %v208 = vld [vmem:[%s2 + $0x548] sm:$0xff]
    %v209 = vld [vmem:[%s2 + $0x550] sm:$0xff]
    %v210 = vld [vmem:[%s2 + $0x558] sm:$0xff]
    %v211 = vld [vmem:[%s2 + $0x560] sm:$0xff]
    %v212 = vld [vmem:[%s2 + $0x568] sm:$0xff]
    %v213 = vld [vmem:[%s2 + $0x570] sm:$0xff]
    %v214 = vld [vmem:[%s2 + $0x578] sm:$0xff]
    %v215 = vld [vmem:[%s2 + $0x580] sm:$0xff]
    %v216 = vld [vmem:[%s2 + $0x588] sm:$0xff]
    %v217 = vld [vmem:[%s2 + $0x590] sm:$0xff]
    %v218 = vld [vmem:[%s2 + $0x598] sm:$0xff]
    %v219 = vld [vmem:[%s2 + $0x5a0] sm:$0xff]
    %v220 = vld [vmem:[%s2 + $0x5a8] sm:$0xff]
    %v221 = vld [vmem:[%s2 + $0x5b0] sm:$0xff]
    %v222 = vld [vmem:[%s2 + $0x5b8] sm:$0xff]
    %v223 = vld [vmem:[%s2 + $0x5c0] sm:$0xff]
    %v224 = vld [vmem:[%s2 + $0x5c8] sm:$0xff]
    %v225 = vld [vmem:[%s2 + $0x5d0] sm:$0xff]
    %v226 = vld [vmem:[%s2 + $0x5d8] sm:$0xff]
    %v227 = vld [vmem:[%s2 + $0x5e0] sm:$0xff]
    %v228 = vld [vmem:[%s2 + $0x5e8] sm:$0xff]
    %v229 = vld [vmem:[%s2 + $0x5f0] sm:$0xff]
    %v230 = vld [vmem:[%s2 + $0x5f8] sm:$0xff]
    %v231 = vld [vmem:[%s1] sm:$0x1]
    %v232 = vld [vmem:[%s1 + $0x1] sm:$0x1]
    %v233 = vld [vmem:[%s1 + $0x2] sm:$0x1]
    %v234 = vld [vmem:[%s1 + $0x3] sm:$0x1]
    %v235 = vld [vmem:[%s3] sm:$0xff]
    %v236 = vld [vmem:[%s3 + $0x8] sm:$0xff]
    %v237 = vld [vmem:[%s3 + $0x10] sm:$0xff]
    %v238 = vld [vmem:[%s3 + $0x18] sm:$0xff]
    %v239 = vld [vmem:[%s3 + $0x20] sm:$0xff]
    %v240 = vld [vmem:[%s3 + $0x28] sm:$0xff]
    %v241 = vld [vmem:[%s3 + $0x30] sm:$0xff]
    %v242 = vld [vmem:[%s3 + $0x38] sm:$0xff]
    %v247 = vcombine.low %v231, %v232
    %v248 = vcombine.low %v233, %v234
    %v250 = vunpack.c.l.s4 1966171168
    %v251 = vunpack.c.0.s8 %v250
    %v252 = vlaneseq
    %v253 = vshrl.u32 %v252, 7
    %v254 = vsub.s32 %v251, %v253
    %v255 = vrot.slane %v247, %v254
    %v257 = vunpack.c.l.s4 1966171168
    %v258 = vunpack.c.0.s8 %v257
    %v259 = vlaneseq
    %v260 = vshrl.u32 %v259, 7
    %v261 = vsub.s32 %v258, %v260
    %v262 = vrot.slane %v248, %v261
    %v263 = vcombine.low %v255, %v262
    %v265 = vunpack.c.l.s4 1966171168
    %v266 = vunpack.c.0.s8 %v265
    %v267 = vlaneseq
    %v268 = vshrl.u32 %v267, 7
    %v269 = vsub.s32 %v266, %v268
    %v270 = vrot.slane %v263, %v269
    %v279 = vunpack.c.l.b16 %v235
    %v280 = vunpack.c.h.b16 %v235
    %v281 = vunpack.c.l.b16 %v236
    %v282 = vunpack.c.h.b16 %v236
    %v283 = vunpack.c.l.b16 %v237
    %v284 = vunpack.c.h.b16 %v237
    %v285 = vunpack.c.l.b16 %v238
    %v286 = vunpack.c.h.b16 %v238
    %v287 = vunpack.c.l.b16 %v239
    %v288 = vunpack.c.h.b16 %v239
    %v289 = vunpack.c.l.b16 %v240
    %v290 = vunpack.c.h.b16 %v240
    %v291 = vunpack.c.l.b16 %v241
    %v292 = vunpack.c.h.b16 %v241
    %v293 = vunpack.c.l.b16 %v242
    %v294 = vunpack.c.h.b16 %v242
    %v295 = vpack.c.b16 %v283, %v279
    %v296 = vpack.c.b16 %v284, %v280
    %v297 = vpack.c.b16 %v285, %v281
    %v298 = vpack.c.b16 %v286, %v282
    %v299 = vpack.c.b16 %v291, %v287
    %v300 = vpack.c.b16 %v292, %v288
    %v301 = vpack.c.b16 %v293, %v289
    %v302 = vpack.c.b16 %v294, %v290
    %vm311 = vcmask 261120
    %v313 = vsel %vm311, %v270, 0
    %315 = vmatprep.subr.bf16.mxu0 %v296
    %316 = vmatpush1.bf16.msra.mxu0 %v295
    %317 = vmatprep.subr.bf16.mxu0 %v300
    %318 = vmatpush1.bf16.msra.mxu0 %v299
    %319 = vmatprep.subr.bf16.mxu0 0
    %320 = vmatpush1.bf16.msra.mxu0 0
    %321 = vmatprep.subr.bf16.mxu0 0
    %322 = vmatpush1.bf16.msra.mxu0 0
    %323 = vmatprep.subr.bf16.mxu0 0
    %324 = vmatpush1.bf16.msra.mxu0 0
    %325 = vmatprep.subr.bf16.mxu0 0
    %326 = vmatpush1.bf16.msra.mxu0 0
    %327 = vmatprep.subr.bf16.mxu0 0
    %328 = vmatpush1.bf16.msra.mxu0 0
    %329 = vmatprep.subr.bf16.mxu0 0
    %330 = vmatpush1.bf16.msra.mxu0 0
    %331 = vmatprep.subr.bf16.mxu0 0
    %332 = vmatpush1.bf16.msra.mxu0 0
    %333 = vmatprep.subr.bf16.mxu0 0
    %334 = vmatpush1.bf16.msra.mxu0 0
    %335 = vmatprep.subr.bf16.mxu0 0
    %336 = vmatpush1.bf16.msra.mxu0 0
    %337 = vmatprep.subr.bf16.mxu0 0
    %338 = vmatpush1.bf16.msra.mxu0 0
    %339 = vmatprep.subr.bf16.mxu0 0
    %340 = vmatpush1.bf16.msra.mxu0 0
    %341 = vmatprep.subr.bf16.mxu0 0
    %342 = vmatpush1.bf16.msra.mxu0 0
    %343 = vmatprep.subr.bf16.mxu0 0
    %344 = vmatpush1.bf16.msra.mxu0 0
    %345 = vmatprep.subr.bf16.mxu0 0
    %346 = vmatpush1.bf16.msra.mxu0 0
    %347 = vmatprep.mubr.bf16.mxu0 0
    %348 = vmatmul.mubr.bf16.gmra.mrb[0].mxu0 %v313
    %v349 = vpop.f32.mrb[0].mxu0
    %v350 = vadd.f32 0.0, %v349
    %v351 = vpop.f32.mrb[0].mxu0
    %v352 = vadd.f32 0.0, %v351
    %v353 = vpop.f32.mrb[0].mxu0
    %v354 = vpop.f32.mrb[0].mxu0
    %355 = vdwg.mxu0
    %356 = vmatprep.subr.bf16.mxu0 %v298
    %357 = vmatpush1.bf16.msra.mxu0 %v297
    %358 = vmatprep.subr.bf16.mxu0 %v302
    %359 = vmatpush1.bf16.msra.mxu0 %v301
    %360 = vmatprep.subr.bf16.mxu0 0
    %361 = vmatpush1.bf16.msra.mxu0 0
    %362 = vmatprep.subr.bf16.mxu0 0
    %363 = vmatpush1.bf16.msra.mxu0 0
    %364 = vmatprep.subr.bf16.mxu0 0
    %365 = vmatpush1.bf16.msra.mxu0 0
    %366 = vmatprep.subr.bf16.mxu0 0
    %367 = vmatpush1.bf16.msra.mxu0 0
    %368 = vmatprep.subr.bf16.mxu0 0
    %369 = vmatpush1.bf16.msra.mxu0 0
    %370 = vmatprep.subr.bf16.mxu0 0
    %371 = vmatpush1.bf16.msra.mxu0 0
    %372 = vmatprep.subr.bf16.mxu0 0
    %373 = vmatpush1.bf16.msra.mxu0 0
    %374 = vmatprep.subr.bf16.mxu0 0
    %375 = vmatpush1.bf16.msra.mxu0 0
    %376 = vmatprep.subr.bf16.mxu0 0
    %377 = vmatpush1.bf16.msra.mxu0 0
    %378 = vmatprep.subr.bf16.mxu0 0
    %379 = vmatpush1.bf16.msra.mxu0 0
    %380 = vmatprep.subr.bf16.mxu0 0
    %381 = vmatpush1.bf16.msra.mxu0 0
    %382 = vmatprep.subr.bf16.mxu0 0
    %383 = vmatpush1.bf16.msra.mxu0 0
    %384 = vmatprep.subr.bf16.mxu0 0
    %385 = vmatpush1.bf16.msra.mxu0 0
    %386 = vmatprep.subr.bf16.mxu0 0
    %387 = vmatpush1.bf16.msra.mxu0 0
    %388 = vmatprep.mubr.bf16.mxu0 0
    %389 = vmatmul.mubr.bf16.gmra.mrb[0].mxu0 %v313
    %v390 = vpop.f32.mrb[0].mxu0
    %v391 = vadd.f32 0.0, %v390
    %v392 = vpop.f32.mrb[0].mxu0
    %v393 = vadd.f32 0.0, %v392
    %v394 = vpop.f32.mrb[0].mxu0
    %v395 = vpop.f32.mrb[0].mxu0
    %396 = vdwg.mxu0
    %v401 = vcombine.low %v35, %v36
    %v402 = vcombine.high %v35, %v36
    %v403 = vcombine.low %v37, %v38
    %v404 = vcombine.high %v37, %v38
    %v406 = vunpack.c.l.s4 1966171168
    %v407 = vunpack.c.0.s8 %v406
    %v408 = vlaneseq
    %v409 = vshrl.u32 %v408, 7
    %v410 = vsub.s32 %v407, %v409
    %v411 = vrot.slane %v401, %v410
    %v413 = vunpack.c.l.s4 1966171168
    %v414 = vunpack.c.0.s8 %v413
    %v415 = vlaneseq
    %v416 = vshrl.u32 %v415, 7
    %v417 = vsub.s32 %v414, %v416
    %v418 = vrot.slane %v402, %v417
    %v420 = vunpack.c.l.s4 1966171168
    %v421 = vunpack.c.0.s8 %v420
    %v422 = vlaneseq
    %v423 = vshrl.u32 %v422, 7
    %v424 = vsub.s32 %v421, %v423
    %v425 = vrot.slane %v403, %v424
    %v427 = vunpack.c.l.s4 1966171168
    %v428 = vunpack.c.0.s8 %v427
    %v429 = vlaneseq
    %v430 = vshrl.u32 %v429, 7
    %v431 = vsub.s32 %v428, %v430
    %v432 = vrot.slane %v404, %v431
    %v433 = vcombine.low %v411, %v425
    %v434 = vcombine.high %v411, %v425
    %v435 = vcombine.low %v418, %v432
    %v436 = vcombine.high %v418, %v432
    %v438 = vunpack.c.l.s4 1966171168
    %v439 = vunpack.c.0.s8 %v438
    %v440 = vlaneseq
    %v441 = vshrl.u32 %v440, 7
    %v442 = vsub.s32 %v439, %v441
    %v443 = vrot.slane %v433, %v442
    %v445 = vunpack.c.l.s4 1966171168
    %v446 = vunpack.c.0.s8 %v445
    %v447 = vlaneseq
    %v448 = vshrl.u32 %v447, 7
    %v449 = vsub.s32 %v446, %v448
    %v450 = vrot.slane %v435, %v449
    %v452 = vunpack.c.l.s4 1966171168
    %v453 = vunpack.c.0.s8 %v452
    %v454 = vlaneseq
    %v455 = vshrl.u32 %v454, 7
    %v456 = vsub.s32 %v453, %v455
    %v457 = vrot.slane %v434, %v456
    %v459 = vunpack.c.l.s4 1966171168
    %v460 = vunpack.c.0.s8 %v459
    %v461 = vlaneseq
    %v462 = vshrl.u32 %v461, 7
    %v463 = vsub.s32 %v460, %v462
    %v464 = vrot.slane %v436, %v463
    %v465 = vcombine.high %v443, %v443
    %v466 = vcombine.high %v457, %v457
    %v665 = vunpack.c.l.b16 %v39
    %v666 = vunpack.c.h.b16 %v39
    %v667 = vunpack.c.l.b16 %v40
    %v668 = vunpack.c.h.b16 %v40
    %v669 = vunpack.c.l.b16 %v41
    %v670 = vunpack.c.h.b16 %v41
    %v671 = vunpack.c.l.b16 %v42
    %v672 = vunpack.c.h.b16 %v42
    %v673 = vunpack.c.l.b16 %v43
    %v674 = vunpack.c.h.b16 %v43
    %v675 = vunpack.c.l.b16 %v44
    %v676 = vunpack.c.h.b16 %v44
    %v677 = vunpack.c.l.b16 %v45
    %v678 = vunpack.c.h.b16 %v45
    %v679 = vunpack.c.l.b16 %v46
    %v680 = vunpack.c.h.b16 %v46
    %v681 = vunpack.c.l.b16 %v47
    %v682 = vunpack.c.h.b16 %v47
    %v683 = vunpack.c.l.b16 %v48
    %v684 = vunpack.c.h.b16 %v48
    %v685 = vunpack.c.l.b16 %v49
    %v686 = vunpack.c.h.b16 %v49
    %v687 = vunpack.c.l.b16 %v50
    %v688 = vunpack.c.h.b16 %v50
    %v689 = vunpack.c.l.b16 %v51
    %v690 = vunpack.c.h.b16 %v51
    %v691 = vunpack.c.l.b16 %v52
    %v692 = vunpack.c.h.b16 %v52
    %v693 = vunpack.c.l.b16 %v53
    %v694 = vunpack.c.h.b16 %v53
    %v695 = vunpack.c.l.b16 %v54
    %v696 = vunpack.c.h.b16 %v54
    %v697 = vunpack.c.l.b16 %v55
    %v698 = vunpack.c.h.b16 %v55
    %v699 = vunpack.c.l.b16 %v56
    %v700 = vunpack.c.h.b16 %v56
    %v701 = vunpack.c.l.b16 %v57
    %v702 = vunpack.c.h.b16 %v57
    %v703 = vunpack.c.l.b16 %v58
    %v704 = vunpack.c.h.b16 %v58
    %v705 = vunpack.c.l.b16 %v59
    %v706 = vunpack.c.h.b16 %v59
    %v707 = vunpack.c.l.b16 %v60
    %v708 = vunpack.c.h.b16 %v60
    %v709 = vunpack.c.l.b16 %v61
    %v710 = vunpack.c.h.b16 %v61
    %v711 = vunpack.c.l.b16 %v62
    %v712 = vunpack.c.h.b16 %v62
    %v713 = vunpack.c.l.b16 %v63
    %v714 = vunpack.c.h.b16 %v63
    %v715 = vunpack.c.l.b16 %v64
    %v716 = vunpack.c.h.b16 %v64
    %v717 = vunpack.c.l.b16 %v65
    %v718 = vunpack.c.h.b16 %v65
    %v719 = vunpack.c.l.b16 %v66
    %v720 = vunpack.c.h.b16 %v66
    %v721 = vunpack.c.l.b16 %v67
    %v722 = vunpack.c.h.b16 %v67
    %v723 = vunpack.c.l.b16 %v68
    %v724 = vunpack.c.h.b16 %v68
    %v725 = vunpack.c.l.b16 %v69
    %v726 = vunpack.c.h.b16 %v69
    %v727 = vunpack.c.l.b16 %v70
    %v728 = vunpack.c.h.b16 %v70
    %v729 = vunpack.c.l.b16 %v71
    %v730 = vunpack.c.h.b16 %v71
    %v731 = vunpack.c.l.b16 %v72
    %v732 = vunpack.c.h.b16 %v72
    %v733 = vunpack.c.l.b16 %v73
    %v734 = vunpack.c.h.b16 %v73
    %v735 = vunpack.c.l.b16 %v74
    %v736 = vunpack.c.h.b16 %v74
    %v737 = vunpack.c.l.b16 %v75
    %v738 = vunpack.c.h.b16 %v75
    %v739 = vunpack.c.l.b16 %v76
    %v740 = vunpack.c.h.b16 %v76
    %v741 = vunpack.c.l.b16 %v77
    %v742 = vunpack.c.h.b16 %v77
    %v743 = vunpack.c.l.b16 %v78
    %v744 = vunpack.c.h.b16 %v78
    %v745 = vunpack.c.l.b16 %v79
    %v746 = vunpack.c.h.b16 %v79
    %v747 = vunpack.c.l.b16 %v80
    %v748 = vunpack.c.h.b16 %v80
    %v749 = vunpack.c.l.b16 %v81
    %v750 = vunpack.c.h.b16 %v81
    %v751 = vunpack.c.l.b16 %v82
    %v752 = vunpack.c.h.b16 %v82
    %v753 = vunpack.c.l.b16 %v83
    %v754 = vunpack.c.h.b16 %v83
    %v755 = vunpack.c.l.b16 %v84
    %v756 = vunpack.c.h.b16 %v84
    %v757 = vunpack.c.l.b16 %v85
    %v758 = vunpack.c.h.b16 %v85
    %v759 = vunpack.c.l.b16 %v86
    %v760 = vunpack.c.h.b16 %v86
    %v761 = vunpack.c.l.b16 %v87
    %v762 = vunpack.c.h.b16 %v87
    %v763 = vunpack.c.l.b16 %v88
    %v764 = vunpack.c.h.b16 %v88
    %v765 = vunpack.c.l.b16 %v89
    %v766 = vunpack.c.h.b16 %v89
    %v767 = vunpack.c.l.b16 %v90
    %v768 = vunpack.c.h.b16 %v90
    %v769 = vunpack.c.l.b16 %v91
    %v770 = vunpack.c.h.b16 %v91
    %v771 = vunpack.c.l.b16 %v92
    %v772 = vunpack.c.h.b16 %v92
    %v773 = vunpack.c.l.b16 %v93
    %v774 = vunpack.c.h.b16 %v93
    %v775 = vunpack.c.l.b16 %v94
    %v776 = vunpack.c.h.b16 %v94
    %v777 = vunpack.c.l.b16 %v95
    %v778 = vunpack.c.h.b16 %v95
    %v779 = vunpack.c.l.b16 %v96
    %v780 = vunpack.c.h.b16 %v96
    %v781 = vunpack.c.l.b16 %v97
    %v782 = vunpack.c.h.b16 %v97
    %v783 = vunpack.c.l.b16 %v98
    %v784 = vunpack.c.h.b16 %v98
    %v785 = vunpack.c.l.b16 %v99
    %v786 = vunpack.c.h.b16 %v99
    %v787 = vunpack.c.l.b16 %v100
    %v788 = vunpack.c.h.b16 %v100
    %v789 = vunpack.c.l.b16 %v101
    %v790 = vunpack.c.h.b16 %v101
    %v791 = vunpack.c.l.b16 %v102
    %v792 = vunpack.c.h.b16 %v102
    %v793 = vunpack.c.l.b16 %v103
    %v794 = vunpack.c.h.b16 %v103
    %v795 = vunpack.c.l.b16 %v104
    %v796 = vunpack.c.h.b16 %v104
    %v797 = vunpack.c.l.b16 %v105
    %v798 = vunpack.c.h.b16 %v105
    %v799 = vunpack.c.l.b16 %v106
    %v800 = vunpack.c.h.b16 %v106
    %v801 = vunpack.c.l.b16 %v107
    %v802 = vunpack.c.h.b16 %v107
    %v803 = vunpack.c.l.b16 %v108
    %v804 = vunpack.c.h.b16 %v108
    %v805 = vunpack.c.l.b16 %v109
    %v806 = vunpack.c.h.b16 %v109
    %v807 = vunpack.c.l.b16 %v110
    %v808 = vunpack.c.h.b16 %v110
    %v809 = vunpack.c.l.b16 %v111
    %v810 = vunpack.c.h.b16 %v111
    %v811 = vunpack.c.l.b16 %v112
    %v812 = vunpack.c.h.b16 %v112
    %v813 = vunpack.c.l.b16 %v113
    %v814 = vunpack.c.h.b16 %v113
    %v815 = vunpack.c.l.b16 %v114
    %v816 = vunpack.c.h.b16 %v114
    %v817 = vunpack.c.l.b16 %v115
    %v818 = vunpack.c.h.b16 %v115
    %v819 = vunpack.c.l.b16 %v116
    %v820 = vunpack.c.h.b16 %v116
    %v821 = vunpack.c.l.b16 %v117
    %v822 = vunpack.c.h.b16 %v117
    %v823 = vunpack.c.l.b16 %v118
    %v824 = vunpack.c.h.b16 %v118
    %v825 = vunpack.c.l.b16 %v119
    %v826 = vunpack.c.h.b16 %v119
    %v827 = vunpack.c.l.b16 %v120
    %v828 = vunpack.c.h.b16 %v120
    %v829 = vunpack.c.l.b16 %v121
    %v830 = vunpack.c.h.b16 %v121
    %v831 = vunpack.c.l.b16 %v122
    %v832 = vunpack.c.h.b16 %v122
    %v833 = vunpack.c.l.b16 %v123
    %v834 = vunpack.c.h.b16 %v123
    %v835 = vunpack.c.l.b16 %v124
    %v836 = vunpack.c.h.b16 %v124
    %v837 = vunpack.c.l.b16 %v125
    %v838 = vunpack.c.h.b16 %v125
    %v839 = vunpack.c.l.b16 %v126
    %v840 = vunpack.c.h.b16 %v126
    %v841 = vunpack.c.l.b16 %v127
    %v842 = vunpack.c.h.b16 %v127
    %v843 = vunpack.c.l.b16 %v128
    %v844 = vunpack.c.h.b16 %v128
    %v845 = vunpack.c.l.b16 %v129
    %v846 = vunpack.c.h.b16 %v129
    %v847 = vunpack.c.l.b16 %v130
    %v848 = vunpack.c.h.b16 %v130
    %v849 = vunpack.c.l.b16 %v131
    %v850 = vunpack.c.h.b16 %v131
    %v851 = vunpack.c.l.b16 %v132
    %v852 = vunpack.c.h.b16 %v132
    %v853 = vunpack.c.l.b16 %v133
    %v854 = vunpack.c.h.b16 %v133
    %v855 = vunpack.c.l.b16 %v134
    %v856 = vunpack.c.h.b16 %v134
    %v857 = vunpack.c.l.b16 %v135
    %v858 = vunpack.c.h.b16 %v135
    %v859 = vunpack.c.l.b16 %v136
    %v860 = vunpack.c.h.b16 %v136
    %v861 = vunpack.c.l.b16 %v137
    %v862 = vunpack.c.h.b16 %v137
    %v863 = vunpack.c.l.b16 %v138
    %v864 = vunpack.c.h.b16 %v138
    %v865 = vunpack.c.l.b16 %v139
    %v866 = vunpack.c.h.b16 %v139
    %v867 = vunpack.c.l.b16 %v140
    %v868 = vunpack.c.h.b16 %v140
    %v869 = vunpack.c.l.b16 %v141
    %v870 = vunpack.c.h.b16 %v141
    %v871 = vunpack.c.l.b16 %v142
    %v872 = vunpack.c.h.b16 %v142
    %v873 = vunpack.c.l.b16 %v143
    %v874 = vunpack.c.h.b16 %v143
    %v875 = vunpack.c.l.b16 %v144
    %v876 = vunpack.c.h.b16 %v144
    %v877 = vunpack.c.l.b16 %v145
    %v878 = vunpack.c.h.b16 %v145
    %v879 = vunpack.c.l.b16 %v146
    %v880 = vunpack.c.h.b16 %v146
    %v881 = vunpack.c.l.b16 %v147
    %v882 = vunpack.c.h.b16 %v147
    %v883 = vunpack.c.l.b16 %v148
    %v884 = vunpack.c.h.b16 %v148
    %v885 = vunpack.c.l.b16 %v149
    %v886 = vunpack.c.h.b16 %v149
    %v887 = vunpack.c.l.b16 %v150
    %v888 = vunpack.c.h.b16 %v150
    %v889 = vunpack.c.l.b16 %v151
    %v890 = vunpack.c.h.b16 %v151
    %v891 = vunpack.c.l.b16 %v152
    %v892 = vunpack.c.h.b16 %v152
    %v893 = vunpack.c.l.b16 %v153
    %v894 = vunpack.c.h.b16 %v153
    %v895 = vunpack.c.l.b16 %v154
    %v896 = vunpack.c.h.b16 %v154
    %v897 = vunpack.c.l.b16 %v155
    %v898 = vunpack.c.h.b16 %v155
    %v899 = vunpack.c.l.b16 %v156
    %v900 = vunpack.c.h.b16 %v156
    %v901 = vunpack.c.l.b16 %v157
    %v902 = vunpack.c.h.b16 %v157
    %v903 = vunpack.c.l.b16 %v158
    %v904 = vunpack.c.h.b16 %v158
    %v905 = vunpack.c.l.b16 %v159
    %v906 = vunpack.c.h.b16 %v159
    %v907 = vunpack.c.l.b16 %v160
    %v908 = vunpack.c.h.b16 %v160
    %v909 = vunpack.c.l.b16 %v161
    %v910 = vunpack.c.h.b16 %v161
    %v911 = vunpack.c.l.b16 %v162
    %v912 = vunpack.c.h.b16 %v162
    %v913 = vunpack.c.l.b16 %v163
    %v914 = vunpack.c.h.b16 %v163
    %v915 = vunpack.c.l.b16 %v164
    %v916 = vunpack.c.h.b16 %v164
    %v917 = vunpack.c.l.b16 %v165
    %v918 = vunpack.c.h.b16 %v165
    %v919 = vunpack.c.l.b16 %v166
    %v920 = vunpack.c.h.b16 %v166
    %v921 = vunpack.c.l.b16 %v167
    %v922 = vunpack.c.h.b16 %v167
    %v923 = vunpack.c.l.b16 %v168
    %v924 = vunpack.c.h.b16 %v168
    %v925 = vunpack.c.l.b16 %v169
    %v926 = vunpack.c.h.b16 %v169
    %v927 = vunpack.c.l.b16 %v170
    %v928 = vunpack.c.h.b16 %v170
    %v929 = vunpack.c.l.b16 %v171
    %v930 = vunpack.c.h.b16 %v171
    %v931 = vunpack.c.l.b16 %v172
    %v932 = vunpack.c.h.b16 %v172
    %v933 = vunpack.c.l.b16 %v173
    %v934 = vunpack.c.h.b16 %v173
    %v935 = vunpack.c.l.b16 %v174
    %v936 = vunpack.c.h.b16 %v174
    %v937 = vunpack.c.l.b16 %v175
    %v938 = vunpack.c.h.b16 %v175
    %v939 = vunpack.c.l.b16 %v176
    %v940 = vunpack.c.h.b16 %v176
    %v941 = vunpack.c.l.b16 %v177
    %v942 = vunpack.c.h.b16 %v177
    %v943 = vunpack.c.l.b16 %v178
    %v944 = vunpack.c.h.b16 %v178
    %v945 = vunpack.c.l.b16 %v179
    %v946 = vunpack.c.h.b16 %v179
    %v947 = vunpack.c.l.b16 %v180
    %v948 = vunpack.c.h.b16 %v180
    %v949 = vunpack.c.l.b16 %v181
    %v950 = vunpack.c.h.b16 %v181
    %v951 = vunpack.c.l.b16 %v182
    %v952 = vunpack.c.h.b16 %v182
    %v953 = vunpack.c.l.b16 %v183
    %v954 = vunpack.c.h.b16 %v183
    %v955 = vunpack.c.l.b16 %v184
    %v956 = vunpack.c.h.b16 %v184
    %v957 = vunpack.c.l.b16 %v185
    %v958 = vunpack.c.h.b16 %v185
    %v959 = vunpack.c.l.b16 %v186
    %v960 = vunpack.c.h.b16 %v186
    %v961 = vunpack.c.l.b16 %v187
    %v962 = vunpack.c.h.b16 %v187
    %v963 = vunpack.c.l.b16 %v188
    %v964 = vunpack.c.h.b16 %v188
    %v965 = vunpack.c.l.b16 %v189
    %v966 = vunpack.c.h.b16 %v189
    %v967 = vunpack.c.l.b16 %v190
    %v968 = vunpack.c.h.b16 %v190
    %v969 = vunpack.c.l.b16 %v191
    %v970 = vunpack.c.h.b16 %v191
    %v971 = vunpack.c.l.b16 %v192
    %v972 = vunpack.c.h.b16 %v192
    %v973 = vunpack.c.l.b16 %v193
    %v974 = vunpack.c.h.b16 %v193
    %v975 = vunpack.c.l.b16 %v194
    %v976 = vunpack.c.h.b16 %v194
    %v977 = vunpack.c.l.b16 %v195
    %v978 = vunpack.c.h.b16 %v195
    %v979 = vunpack.c.l.b16 %v196
    %v980 = vunpack.c.h.b16 %v196
    %v981 = vunpack.c.l.b16 %v197
    %v982 = vunpack.c.h.b16 %v197
    %v983 = vunpack.c.l.b16 %v198
    %v984 = vunpack.c.h.b16 %v198
    %v985 = vunpack.c.l.b16 %v199
    %v986 = vunpack.c.h.b16 %v199
    %v987 = vunpack.c.l.b16 %v200
    %v988 = vunpack.c.h.b16 %v200
    %v989 = vunpack.c.l.b16 %v201
    %v990 = vunpack.c.h.b16 %v201
    %v991 = vunpack.c.l.b16 %v202
    %v992 = vunpack.c.h.b16 %v202
    %v993 = vunpack.c.l.b16 %v203
    %v994 = vunpack.c.h.b16 %v203
    %v995 = vunpack.c.l.b16 %v204
    %v996 = vunpack.c.h.b16 %v204
    %v997 = vunpack.c.l.b16 %v205
    %v998 = vunpack.c.h.b16 %v205
    %v999 = vunpack.c.l.b16 %v206
    %v1000 = vunpack.c.h.b16 %v206
    %v1001 = vunpack.c.l.b16 %v207
    %v1002 = vunpack.c.h.b16 %v207
    %v1003 = vunpack.c.l.b16 %v208
    %v1004 = vunpack.c.h.b16 %v208
    %v1005 = vunpack.c.l.b16 %v209
    %v1006 = vunpack.c.h.b16 %v209
    %v1007 = vunpack.c.l.b16 %v210
    %v1008 = vunpack.c.h.b16 %v210
    %v1009 = vunpack.c.l.b16 %v211
    %v1010 = vunpack.c.h.b16 %v211
    %v1011 = vunpack.c.l.b16 %v212
    %v1012 = vunpack.c.h.b16 %v212
    %v1013 = vunpack.c.l.b16 %v213
    %v1014 = vunpack.c.h.b16 %v213
    %v1015 = vunpack.c.l.b16 %v214
    %v1016 = vunpack.c.h.b16 %v214
    %v1017 = vunpack.c.l.b16 %v215
    %v1018 = vunpack.c.h.b16 %v215
    %v1019 = vunpack.c.l.b16 %v216
    %v1020 = vunpack.c.h.b16 %v216
    %v1021 = vunpack.c.l.b16 %v217
    %v1022 = vunpack.c.h.b16 %v217
    %v1023 = vunpack.c.l.b16 %v218
    %v1024 = vunpack.c.h.b16 %v218
    %v1025 = vunpack.c.l.b16 %v219
    %v1026 = vunpack.c.h.b16 %v219
    %v1027 = vunpack.c.l.b16 %v220
    %v1028 = vunpack.c.h.b16 %v220
    %v1029 = vunpack.c.l.b16 %v221
    %v1030 = vunpack.c.h.b16 %v221
    %v1031 = vunpack.c.l.b16 %v222
    %v1032 = vunpack.c.h.b16 %v222
    %v1033 = vunpack.c.l.b16 %v223
    %v1034 = vunpack.c.h.b16 %v223
    %v1035 = vunpack.c.l.b16 %v224
    %v1036 = vunpack.c.h.b16 %v224
    %v1037 = vunpack.c.l.b16 %v225
    %v1038 = vunpack.c.h.b16 %v225
    %v1039 = vunpack.c.l.b16 %v226
    %v1040 = vunpack.c.h.b16 %v226
    %v1041 = vunpack.c.l.b16 %v227
    %v1042 = vunpack.c.h.b16 %v227
    %v1043 = vunpack.c.l.b16 %v228
    %v1044 = vunpack.c.h.b16 %v228
    %v1045 = vunpack.c.l.b16 %v229
    %v1046 = vunpack.c.h.b16 %v229
    %v1047 = vunpack.c.l.b16 %v230
    %v1048 = vunpack.c.h.b16 %v230
    %v1049 = vpack.c.b16 %v669, %v665
    %v1050 = vpack.c.b16 %v670, %v666
    %v1051 = vpack.c.b16 %v671, %v667
    %v1052 = vpack.c.b16 %v672, %v668
    %v1053 = vpack.c.b16 %v677, %v673
    %v1054 = vpack.c.b16 %v678, %v674
    %v1055 = vpack.c.b16 %v679, %v675
    %v1056 = vpack.c.b16 %v680, %v676
    %v1057 = vpack.c.b16 %v685, %v681
    %v1058 = vpack.c.b16 %v686, %v682
    %v1059 = vpack.c.b16 %v687, %v683
    %v1060 = vpack.c.b16 %v688, %v684
    %v1061 = vpack.c.b16 %v693, %v689
    %v1062 = vpack.c.b16 %v694, %v690
    %v1063 = vpack.c.b16 %v695, %v691
    %v1064 = vpack.c.b16 %v696, %v692
    %v1065 = vpack.c.b16 %v701, %v697
    %v1066 = vpack.c.b16 %v702, %v698
    %v1067 = vpack.c.b16 %v703, %v699
    %v1068 = vpack.c.b16 %v704, %v700
    %v1069 = vpack.c.b16 %v709, %v705
    %v1070 = vpack.c.b16 %v710, %v706
    %v1071 = vpack.c.b16 %v711, %v707
    %v1072 = vpack.c.b16 %v712, %v708
    %v1073 = vpack.c.b16 %v717, %v713
    %v1074 = vpack.c.b16 %v718, %v714
    %v1075 = vpack.c.b16 %v719, %v715
    %v1076 = vpack.c.b16 %v720, %v716
    %v1077 = vpack.c.b16 %v725, %v721
    %v1078 = vpack.c.b16 %v726, %v722
    %v1079 = vpack.c.b16 %v727, %v723
    %v1080 = vpack.c.b16 %v728, %v724
    %v1081 = vpack.c.b16 %v733, %v729
    %v1082 = vpack.c.b16 %v734, %v730
    %v1083 = vpack.c.b16 %v735, %v731
    %v1084 = vpack.c.b16 %v736, %v732
    %v1085 = vpack.c.b16 %v741, %v737
    %v1086 = vpack.c.b16 %v742, %v738
    %v1087 = vpack.c.b16 %v743, %v739
    %v1088 = vpack.c.b16 %v744, %v740
    %v1089 = vpack.c.b16 %v749, %v745
    %v1090 = vpack.c.b16 %v750, %v746
    %v1091 = vpack.c.b16 %v751, %v747
    %v1092 = vpack.c.b16 %v752, %v748
    %v1093 = vpack.c.b16 %v757, %v753
    %v1094 = vpack.c.b16 %v758, %v754
    %v1095 = vpack.c.b16 %v759, %v755
    %v1096 = vpack.c.b16 %v760, %v756
    %v1097 = vpack.c.b16 %v765, %v761
    %v1098 = vpack.c.b16 %v766, %v762
    %v1099 = vpack.c.b16 %v767, %v763
    %v1100 = vpack.c.b16 %v768, %v764
    %v1101 = vpack.c.b16 %v773, %v769
    %v1102 = vpack.c.b16 %v774, %v770
    %v1103 = vpack.c.b16 %v775, %v771
    %v1104 = vpack.c.b16 %v776, %v772
    %v1105 = vpack.c.b16 %v781, %v777
    %v1106 = vpack.c.b16 %v782, %v778
    %v1107 = vpack.c.b16 %v783, %v779
    %v1108 = vpack.c.b16 %v784, %v780
    %v1109 = vpack.c.b16 %v789, %v785
    %v1110 = vpack.c.b16 %v790, %v786
    %v1111 = vpack.c.b16 %v791, %v787
    %v1112 = vpack.c.b16 %v792, %v788
    %v1113 = vpack.c.b16 %v797, %v793
    %v1114 = vpack.c.b16 %v798, %v794
    %v1115 = vpack.c.b16 %v799, %v795
    %v1116 = vpack.c.b16 %v800, %v796
    %v1117 = vpack.c.b16 %v805, %v801
    %v1118 = vpack.c.b16 %v806, %v802
    %v1119 = vpack.c.b16 %v807, %v803
    %v1120 = vpack.c.b16 %v808, %v804
    %v1121 = vpack.c.b16 %v813, %v809
    %v1122 = vpack.c.b16 %v814, %v810
    %v1123 = vpack.c.b16 %v815, %v811
    %v1124 = vpack.c.b16 %v816, %v812
    %v1125 = vpack.c.b16 %v821, %v817
    %v1126 = vpack.c.b16 %v822, %v818
    %v1127 = vpack.c.b16 %v823, %v819
    %v1128 = vpack.c.b16 %v824, %v820
    %v1129 = vpack.c.b16 %v829, %v825
    %v1130 = vpack.c.b16 %v830, %v826
    %v1131 = vpack.c.b16 %v831, %v827
    %v1132 = vpack.c.b16 %v832, %v828
    %v1133 = vpack.c.b16 %v837, %v833
    %v1134 = vpack.c.b16 %v838, %v834
    %v1135 = vpack.c.b16 %v839, %v835
    %v1136 = vpack.c.b16 %v840, %v836
    %v1137 = vpack.c.b16 %v845, %v841
    %v1138 = vpack.c.b16 %v846, %v842
    %v1139 = vpack.c.b16 %v847, %v843
    %v1140 = vpack.c.b16 %v848, %v844
    %v1141 = vpack.c.b16 %v853, %v849
    %v1142 = vpack.c.b16 %v854, %v850
    %v1143 = vpack.c.b16 %v855, %v851
    %v1144 = vpack.c.b16 %v856, %v852
    %v1145 = vpack.c.b16 %v861, %v857
    %v1146 = vpack.c.b16 %v862, %v858
    %v1147 = vpack.c.b16 %v863, %v859
    %v1148 = vpack.c.b16 %v864, %v860
    %v1149 = vpack.c.b16 %v869, %v865
    %v1150 = vpack.c.b16 %v870, %v866
    %v1151 = vpack.c.b16 %v871, %v867
    %v1152 = vpack.c.b16 %v872, %v868
    %v1153 = vpack.c.b16 %v877, %v873
    %v1154 = vpack.c.b16 %v878, %v874
    %v1155 = vpack.c.b16 %v879, %v875
    %v1156 = vpack.c.b16 %v880, %v876
    %v1157 = vpack.c.b16 %v885, %v881
    %v1158 = vpack.c.b16 %v886, %v882
    %v1159 = vpack.c.b16 %v887, %v883
    %v1160 = vpack.c.b16 %v888, %v884
    %v1161 = vpack.c.b16 %v893, %v889
    %v1162 = vpack.c.b16 %v894, %v890
    %v1163 = vpack.c.b16 %v895, %v891
    %v1164 = vpack.c.b16 %v896, %v892
    %v1165 = vpack.c.b16 %v901, %v897
    %v1166 = vpack.c.b16 %v902, %v898
    %v1167 = vpack.c.b16 %v903, %v899
    %v1168 = vpack.c.b16 %v904, %v900
    %v1169 = vpack.c.b16 %v909, %v905
    %v1170 = vpack.c.b16 %v910, %v906
    %v1171 = vpack.c.b16 %v911, %v907
    %v1172 = vpack.c.b16 %v912, %v908
    %v1173 = vpack.c.b16 %v917, %v913
    %v1174 = vpack.c.b16 %v918, %v914
    %v1175 = vpack.c.b16 %v919, %v915
    %v1176 = vpack.c.b16 %v920, %v916
    %v1177 = vpack.c.b16 %v925, %v921
    %v1178 = vpack.c.b16 %v926, %v922
    %v1179 = vpack.c.b16 %v927, %v923
    %v1180 = vpack.c.b16 %v928, %v924
    %v1181 = vpack.c.b16 %v933, %v929
    %v1182 = vpack.c.b16 %v934, %v930
    %v1183 = vpack.c.b16 %v935, %v931
    %v1184 = vpack.c.b16 %v936, %v932
    %v1185 = vpack.c.b16 %v941, %v937
    %v1186 = vpack.c.b16 %v942, %v938
    %v1187 = vpack.c.b16 %v943, %v939
    %v1188 = vpack.c.b16 %v944, %v940
    %v1189 = vpack.c.b16 %v949, %v945
    %v1190 = vpack.c.b16 %v950, %v946
    %v1191 = vpack.c.b16 %v951, %v947
    %v1192 = vpack.c.b16 %v952, %v948
    %v1193 = vpack.c.b16 %v957, %v953
    %v1194 = vpack.c.b16 %v958, %v954
    %v1195 = vpack.c.b16 %v959, %v955
    %v1196 = vpack.c.b16 %v960, %v956
    %v1197 = vpack.c.b16 %v965, %v961
    %v1198 = vpack.c.b16 %v966, %v962
    %v1199 = vpack.c.b16 %v967, %v963
    %v1200 = vpack.c.b16 %v968, %v964
    %v1201 = vpack.c.b16 %v973, %v969
    %v1202 = vpack.c.b16 %v974, %v970
    %v1203 = vpack.c.b16 %v975, %v971
    %v1204 = vpack.c.b16 %v976, %v972
    %v1205 = vpack.c.b16 %v981, %v977
    %v1206 = vpack.c.b16 %v982, %v978
    %v1207 = vpack.c.b16 %v983, %v979
    %v1208 = vpack.c.b16 %v984, %v980
    %v1209 = vpack.c.b16 %v989, %v985
    %v1210 = vpack.c.b16 %v990, %v986
    %v1211 = vpack.c.b16 %v991, %v987
    %v1212 = vpack.c.b16 %v992, %v988
    %v1213 = vpack.c.b16 %v997, %v993
    %v1214 = vpack.c.b16 %v998, %v994
    %v1215 = vpack.c.b16 %v999, %v995
    %v1216 = vpack.c.b16 %v1000, %v996
    %v1217 = vpack.c.b16 %v1005, %v1001
    %v1218 = vpack.c.b16 %v1006, %v1002
    %v1219 = vpack.c.b16 %v1007, %v1003
    %v1220 = vpack.c.b16 %v1008, %v1004
    %v1221 = vpack.c.b16 %v1013, %v1009
    %v1222 = vpack.c.b16 %v1014, %v1010
    %v1223 = vpack.c.b16 %v1015, %v1011
    %v1224 = vpack.c.b16 %v1016, %v1012
    %v1225 = vpack.c.b16 %v1021, %v1017
    %v1226 = vpack.c.b16 %v1022, %v1018
    %v1227 = vpack.c.b16 %v1023, %v1019
    %v1228 = vpack.c.b16 %v1024, %v1020
    %v1229 = vpack.c.b16 %v1029, %v1025
    %v1230 = vpack.c.b16 %v1030, %v1026
    %v1231 = vpack.c.b16 %v1031, %v1027
    %v1232 = vpack.c.b16 %v1032, %v1028
    %v1233 = vpack.c.b16 %v1037, %v1033
    %v1234 = vpack.c.b16 %v1038, %v1034
    %v1235 = vpack.c.b16 %v1039, %v1035
    %v1236 = vpack.c.b16 %v1040, %v1036
    %v1237 = vpack.c.b16 %v1045, %v1041
    %v1238 = vpack.c.b16 %v1046, %v1042
    %v1239 = vpack.c.b16 %v1047, %v1043
    %v1240 = vpack.c.b16 %v1048, %v1044
    %1433 = vmatprep.subr.bf16.mxu0 %v1050
    %1434 = vmatpush1.bf16.msra.mxu0 %v1049
    %1435 = vmatprep.subr.bf16.mxu0 %v1054
    %1436 = vmatpush1.bf16.msra.mxu0 %v1053
    %1437 = vmatprep.subr.bf16.mxu0 %v1058
    %1438 = vmatpush1.bf16.msra.mxu0 %v1057
    %1439 = vmatprep.subr.bf16.mxu0 %v1062
    %1440 = vmatpush1.bf16.msra.mxu0 %v1061
    %1441 = vmatprep.subr.bf16.mxu0 %v1066
    %1442 = vmatpush1.bf16.msra.mxu0 %v1065
    %1443 = vmatprep.subr.bf16.mxu0 %v1070
    %1444 = vmatpush1.bf16.msra.mxu0 %v1069
    %1445 = vmatprep.subr.bf16.mxu0 %v1074
    %1446 = vmatpush1.bf16.msra.mxu0 %v1073
    %1447 = vmatprep.subr.bf16.mxu0 %v1078
    %1448 = vmatpush1.bf16.msra.mxu0 %v1077
    %1449 = vmatprep.subr.bf16.mxu0 %v1082
    %1450 = vmatpush1.bf16.msra.mxu0 %v1081
    %1451 = vmatprep.subr.bf16.mxu0 %v1086
    %1452 = vmatpush1.bf16.msra.mxu0 %v1085
    %1453 = vmatprep.subr.bf16.mxu0 %v1090
    %1454 = vmatpush1.bf16.msra.mxu0 %v1089
    %1455 = vmatprep.subr.bf16.mxu0 %v1094
    %1456 = vmatpush1.bf16.msra.mxu0 %v1093
    %1457 = vmatprep.subr.bf16.mxu0 %v1098
    %1458 = vmatpush1.bf16.msra.mxu0 %v1097
    %1459 = vmatprep.subr.bf16.mxu0 %v1102
    %1460 = vmatpush1.bf16.msra.mxu0 %v1101
    %1461 = vmatprep.subr.bf16.mxu0 %v1106
    %1462 = vmatpush1.bf16.msra.mxu0 %v1105
    %1463 = vmatprep.subr.bf16.mxu0 %v1110
    %1464 = vmatpush1.bf16.msra.mxu0 %v1109
    %1465 = vmatprep.mubr.bf16.mxu0 %v457
    %1466 = vmatmul.mubr.bf16.gmra.mrb[0].mxu0 %v443
    %v1467 = vpop.f32.mrb[0].mxu0
    %v1468 = vadd.f32 %v350, %v1467
    %v1469 = vpop.f32.mrb[0].mxu0
    %v1470 = vadd.f32 %v352, %v1469
    %v1471 = vpop.f32.mrb[0].mxu0
    %v1472 = vpop.f32.mrb[0].mxu0
    %1473 = vdwg.mxu0
    %1474 = vmatprep.subr.bf16.mxu0 %v1114
    %1475 = vmatpush1.bf16.msra.mxu0 %v1113
    %1476 = vmatprep.subr.bf16.mxu0 %v1118
    %1477 = vmatpush1.bf16.msra.mxu0 %v1117
    %1478 = vmatprep.subr.bf16.mxu0 %v1122
    %1479 = vmatpush1.bf16.msra.mxu0 %v1121
    %1480 = vmatprep.subr.bf16.mxu0 %v1126
    %1481 = vmatpush1.bf16.msra.mxu0 %v1125
    %1482 = vmatprep.subr.bf16.mxu0 %v1130
    %1483 = vmatpush1.bf16.msra.mxu0 %v1129
    %1484 = vmatprep.subr.bf16.mxu0 %v1134
    %1485 = vmatpush1.bf16.msra.mxu0 %v1133
    %1486 = vmatprep.subr.bf16.mxu0 %v1138
    %1487 = vmatpush1.bf16.msra.mxu0 %v1137
    %1488 = vmatprep.subr.bf16.mxu0 %v1142
    %1489 = vmatpush1.bf16.msra.mxu0 %v1141
    %1490 = vmatprep.subr.bf16.mxu0 %v1146
    %1491 = vmatpush1.bf16.msra.mxu0 %v1145
    %1492 = vmatprep.subr.bf16.mxu0 %v1150
    %1493 = vmatpush1.bf16.msra.mxu0 %v1149
    %1494 = vmatprep.subr.bf16.mxu0 %v1154
    %1495 = vmatpush1.bf16.msra.mxu0 %v1153
    %1496 = vmatprep.subr.bf16.mxu0 %v1158
    %1497 = vmatpush1.bf16.msra.mxu0 %v1157
    %1498 = vmatprep.subr.bf16.mxu0 %v1162
    %1499 = vmatpush1.bf16.msra.mxu0 %v1161
    %1500 = vmatprep.subr.bf16.mxu0 %v1166
    %1501 = vmatpush1.bf16.msra.mxu0 %v1165
    %1502 = vmatprep.subr.bf16.mxu0 %v1170
    %1503 = vmatpush1.bf16.msra.mxu0 %v1169
    %1504 = vmatprep.subr.bf16.mxu0 %v1174
    %1505 = vmatpush1.bf16.msra.mxu0 %v1173
    %1506 = vmatprep.mubr.bf16.mxu0 %v466
    %1507 = vmatmul.mubr.bf16.gmra.mrb[0].mxu0 %v465
    %v1508 = vpop.f32.mrb[0].mxu0
    %v1509 = vadd.f32 %v1468, %v1508
    %v1510 = vpop.f32.mrb[0].mxu0
    %v1511 = vadd.f32 %v1470, %v1510
    %v1512 = vpop.f32.mrb[0].mxu0
    %v1513 = vpop.f32.mrb[0].mxu0
    %1514 = vdwg.mxu0
    %1515 = vmatprep.subr.bf16.mxu0 %v1178
    %1516 = vmatpush1.bf16.msra.mxu0 %v1177
    %1517 = vmatprep.subr.bf16.mxu0 %v1182
    %1518 = vmatpush1.bf16.msra.mxu0 %v1181
    %1519 = vmatprep.subr.bf16.mxu0 %v1186
    %1520 = vmatpush1.bf16.msra.mxu0 %v1185
    %1521 = vmatprep.subr.bf16.mxu0 %v1190
    %1522 = vmatpush1.bf16.msra.mxu0 %v1189
    %1523 = vmatprep.subr.bf16.mxu0 %v1194
    %1524 = vmatpush1.bf16.msra.mxu0 %v1193
    %1525 = vmatprep.subr.bf16.mxu0 %v1198
    %1526 = vmatpush1.bf16.msra.mxu0 %v1197
    %1527 = vmatprep.subr.bf16.mxu0 %v1202
    %1528 = vmatpush1.bf16.msra.mxu0 %v1201
    %1529 = vmatprep.subr.bf16.mxu0 %v1206
    %1530 = vmatpush1.bf16.msra.mxu0 %v1205
    %1531 = vmatprep.subr.bf16.mxu0 %v1210
    %1532 = vmatpush1.bf16.msra.mxu0 %v1209
    %1533 = vmatprep.subr.bf16.mxu0 %v1214
    %1534 = vmatpush1.bf16.msra.mxu0 %v1213
    %1535 = vmatprep.subr.bf16.mxu0 %v1218
    %1536 = vmatpush1.bf16.msra.mxu0 %v1217
    %1537 = vmatprep.subr.bf16.mxu0 %v1222
    %1538 = vmatpush1.bf16.msra.mxu0 %v1221
    %1539 = vmatprep.subr.bf16.mxu0 %v1226
    %1540 = vmatpush1.bf16.msra.mxu0 %v1225
    %1541 = vmatprep.subr.bf16.mxu0 %v1230
    %1542 = vmatpush1.bf16.msra.mxu0 %v1229
    %1543 = vmatprep.subr.bf16.mxu0 %v1234
    %1544 = vmatpush1.bf16.msra.mxu0 %v1233
    %1545 = vmatprep.subr.bf16.mxu0 %v1238
    %1546 = vmatpush1.bf16.msra.mxu0 %v1237
    %1547 = vmatprep.mubr.bf16.mxu0 %v464
    %1548 = vmatmul.mubr.bf16.gmra.mrb[0].mxu0 %v450
    %v1549 = vpop.f32.mrb[0].mxu0
    %v1550 = vadd.f32 %v1509, %v1549
    %v1551 = vpop.f32.mrb[0].mxu0
    %v1552 = vadd.f32 %v1511, %v1551
    %v1553 = vpop.f32.mrb[0].mxu0
    %v1554 = vpop.f32.mrb[0].mxu0
    %1555 = vdwg.mxu0
    %1556 = vmatprep.subr.bf16.mxu0 %v1052
    %1557 = vmatpush1.bf16.msra.mxu0 %v1051
    %1558 = vmatprep.subr.bf16.mxu0 %v1056
    %1559 = vmatpush1.bf16.msra.mxu0 %v1055
    %1560 = vmatprep.subr.bf16.mxu0 %v1060
    %1561 = vmatpush1.bf16.msra.mxu0 %v1059
    %1562 = vmatprep.subr.bf16.mxu0 %v1064
    %1563 = vmatpush1.bf16.msra.mxu0 %v1063
    %1564 = vmatprep.subr.bf16.mxu0 %v1068
    %1565 = vmatpush1.bf16.msra.mxu0 %v1067
    %1566 = vmatprep.subr.bf16.mxu0 %v1072
    %1567 = vmatpush1.bf16.msra.mxu0 %v1071
    %1568 = vmatprep.subr.bf16.mxu0 %v1076
    %1569 = vmatpush1.bf16.msra.mxu0 %v1075
    %1570 = vmatprep.subr.bf16.mxu0 %v1080
    %1571 = vmatpush1.bf16.msra.mxu0 %v1079
    %1572 = vmatprep.subr.bf16.mxu0 %v1084
    %1573 = vmatpush1.bf16.msra.mxu0 %v1083
    %1574 = vmatprep.subr.bf16.mxu0 %v1088
    %1575 = vmatpush1.bf16.msra.mxu0 %v1087
    %1576 = vmatprep.subr.bf16.mxu0 %v1092
    %1577 = vmatpush1.bf16.msra.mxu0 %v1091
    %1578 = vmatprep.subr.bf16.mxu0 %v1096
    %1579 = vmatpush1.bf16.msra.mxu0 %v1095
    %1580 = vmatprep.subr.bf16.mxu0 %v1100
    %1581 = vmatpush1.bf16.msra.mxu0 %v1099
    %1582 = vmatprep.subr.bf16.mxu0 %v1104
    %1583 = vmatpush1.bf16.msra.mxu0 %v1103
    %1584 = vmatprep.subr.bf16.mxu0 %v1108
    %1585 = vmatpush1.bf16.msra.mxu0 %v1107
    %1586 = vmatprep.subr.bf16.mxu0 %v1112
    %1587 = vmatpush1.bf16.msra.mxu0 %v1111
    %1588 = vmatprep.mubr.bf16.mxu0 %v457
    %1589 = vmatmul.mubr.bf16.gmra.mrb[0].mxu0 %v443
    %v1590 = vpop.f32.mrb[0].mxu0
    %v1591 = vadd.f32 %v391, %v1590
    %v1592 = vpop.f32.mrb[0].mxu0
    %v1593 = vadd.f32 %v393, %v1592
    %v1594 = vpop.f32.mrb[0].mxu0
    %v1595 = vpop.f32.mrb[0].mxu0
    %1596 = vdwg.mxu0
    %1597 = vmatprep.subr.bf16.mxu0 %v1116
    %1598 = vmatpush1.bf16.msra.mxu0 %v1115
    %1599 = vmatprep.subr.bf16.mxu0 %v1120
    %1600 = vmatpush1.bf16.msra.mxu0 %v1119
    %1601 = vmatprep.subr.bf16.mxu0 %v1124
    %1602 = vmatpush1.bf16.msra.mxu0 %v1123
    %1603 = vmatprep.subr.bf16.mxu0 %v1128
    %1604 = vmatpush1.bf16.msra.mxu0 %v1127
    %1605 = vmatprep.subr.bf16.mxu0 %v1132
    %1606 = vmatpush1.bf16.msra.mxu0 %v1131
    %1607 = vmatprep.subr.bf16.mxu0 %v1136
    %1608 = vmatpush1.bf16.msra.mxu0 %v1135
    %1609 = vmatprep.subr.bf16.mxu0 %v1140
    %1610 = vmatpush1.bf16.msra.mxu0 %v1139
    %1611 = vmatprep.subr.bf16.mxu0 %v1144
    %1612 = vmatpush1.bf16.msra.mxu0 %v1143
    %1613 = vmatprep.subr.bf16.mxu0 %v1148
    %1614 = vmatpush1.bf16.msra.mxu0 %v1147
    %1615 = vmatprep.subr.bf16.mxu0 %v1152
    %1616 = vmatpush1.bf16.msra.mxu0 %v1151
    %1617 = vmatprep.subr.bf16.mxu0 %v1156
    %1618 = vmatpush1.bf16.msra.mxu0 %v1155
    %1619 = vmatprep.subr.bf16.mxu0 %v1160
    %1620 = vmatpush1.bf16.msra.mxu0 %v1159
    %1621 = vmatprep.subr.bf16.mxu0 %v1164
    %1622 = vmatpush1.bf16.msra.mxu0 %v1163
    %1623 = vmatprep.subr.bf16.mxu0 %v1168
    %1624 = vmatpush1.bf16.msra.mxu0 %v1167
    %1625 = vmatprep.subr.bf16.mxu0 %v1172
    %1626 = vmatpush1.bf16.msra.mxu0 %v1171
    %1627 = vmatprep.subr.bf16.mxu0 %v1176
    %1628 = vmatpush1.bf16.msra.mxu0 %v1175
    %1629 = vmatprep.mubr.bf16.mxu0 %v466
    %1630 = vmatmul.mubr.bf16.gmra.mrb[0].mxu0 %v465
    %v1631 = vpop.f32.mrb[0].mxu0
    %v1632 = vadd.f32 %v1591, %v1631
    %v1633 = vpop.f32.mrb[0].mxu0
    %v1634 = vadd.f32 %v1593, %v1633
    %v1635 = vpop.f32.mrb[0].mxu0
    %v1636 = vpop.f32.mrb[0].mxu0
    %1637 = vdwg.mxu0
    %1638 = vmatprep.subr.bf16.mxu0 %v1180
    %1639 = vmatpush1.bf16.msra.mxu0 %v1179
    %1640 = vmatprep.subr.bf16.mxu0 %v1184
    %1641 = vmatpush1.bf16.msra.mxu0 %v1183
    %1642 = vmatprep.subr.bf16.mxu0 %v1188
    %1643 = vmatpush1.bf16.msra.mxu0 %v1187
    %1644 = vmatprep.subr.bf16.mxu0 %v1192
    %1645 = vmatpush1.bf16.msra.mxu0 %v1191
    %1646 = vmatprep.subr.bf16.mxu0 %v1196
    %1647 = vmatpush1.bf16.msra.mxu0 %v1195
    %1648 = vmatprep.subr.bf16.mxu0 %v1200
    %1649 = vmatpush1.bf16.msra.mxu0 %v1199
    %1650 = vmatprep.subr.bf16.mxu0 %v1204
    %1651 = vmatpush1.bf16.msra.mxu0 %v1203
    %1652 = vmatprep.subr.bf16.mxu0 %v1208
    %1653 = vmatpush1.bf16.msra.mxu0 %v1207
    %1654 = vmatprep.subr.bf16.mxu0 %v1212
    %1655 = vmatpush1.bf16.msra.mxu0 %v1211
    %1656 = vmatprep.subr.bf16.mxu0 %v1216
    %1657 = vmatpush1.bf16.msra.mxu0 %v1215
    %1658 = vmatprep.subr.bf16.mxu0 %v1220
    %1659 = vmatpush1.bf16.msra.mxu0 %v1219
    %1660 = vmatprep.subr.bf16.mxu0 %v1224
    %1661 = vmatpush1.bf16.msra.mxu0 %v1223
    %1662 = vmatprep.subr.bf16.mxu0 %v1228
    %1663 = vmatpush1.bf16.msra.mxu0 %v1227
    %1664 = vmatprep.subr.bf16.mxu0 %v1232
    %1665 = vmatpush1.bf16.msra.mxu0 %v1231
    %1666 = vmatprep.subr.bf16.mxu0 %v1236
    %1667 = vmatpush1.bf16.msra.mxu0 %v1235
    %1668 = vmatprep.subr.bf16.mxu0 %v1240
    %1669 = vmatpush1.bf16.msra.mxu0 %v1239
    %1670 = vmatprep.mubr.bf16.mxu0 %v464
    %1671 = vmatmul.mubr.bf16.gmra.mrb[0].mxu0 %v450
    %v1672 = vpop.f32.mrb[0].mxu0
    %v1673 = vadd.f32 %v1632, %v1672
    %v1674 = vpop.f32.mrb[0].mxu0
    %v1675 = vadd.f32 %v1634, %v1674
    %v1676 = vpop.f32.mrb[0].mxu0
    %v1677 = vpop.f32.mrb[0].mxu0
    %1678 = vdwg.mxu0
    %v1679 = vld [vmem:[%s4] sm:$0xf]
    %v1681 = vlaneseq
    %v1682 = vshrl.u32 %v1681, 7
    %v1683 = vsub.s32 0, %v1682
    %v1684 = vrot.slane %v1679, %v1683
    %v1685 = vlaneseq
    %v1686 = vshrl.u32 %v1685, 7
    %v1687 = vsub.s32 1, %v1686
    %v1688 = vrot.slane %v1679, %v1687
    %v1689 = vlaneseq
    %v1690 = vshrl.u32 %v1689, 7
    %v1691 = vsub.s32 2, %v1690
    %v1692 = vrot.slane %v1679, %v1691
    %v1693 = vlaneseq
    %v1694 = vshrl.u32 %v1693, 7
    %v1695 = vsub.s32 3, %v1694
    %v1696 = vrot.slane %v1679, %v1695
    %v1701 = vadd.f32 %v1550, %v1684
    %v1702 = vadd.f32 %v1552, %v1688
    %v1703 = vadd.f32 %v1673, %v1692
    %v1704 = vadd.f32 %v1675, %v1696
    %vm1705 = vcmp.gt.f32.partialorder %v1701, 0.0
    %vm1706 = vcmp.gt.f32.partialorder %v1702, 0.0
    %vm1707 = vcmp.gt.f32.partialorder %v1703, 0.0
    %vm1708 = vcmp.gt.f32.partialorder %v1704, 0.0
    %v1709 = vmul.f32 %v1701, 0.2
    %v1710 = vmul.f32 %v1702, 0.2
    %v1711 = vmul.f32 %v1703, 0.2
    %v1712 = vmul.f32 %v1704, 0.2
    %v1713 = vsel %vm1705, %v1701, %v1709
    %v1714 = vsel %vm1706, %v1702, %v1710
    %v1715 = vsel %vm1707, %v1703, %v1711
    %v1716 = vsel %vm1708, %v1704, %v1712
    %v1717 = vpack.c.bf16 %v1713, %v1713
    %v1718 = vpack.c.bf16 %v1714, %v1714
    %v1719 = vpack.c.bf16 %v1715, %v1715
    %v1720 = vpack.c.bf16 %v1716, %v1716
    %v1721 = vld [vmem:[%s5] sm:$0xff]
    %v1722 = vld [vmem:[%s5 + $0x8] sm:$0xff]
    %v1723 = vld [vmem:[%s5 + $0x10] sm:$0xff]
    %v1724 = vld [vmem:[%s5 + $0x18] sm:$0xff]
    %v1725 = vld [vmem:[%s5 + $0x20] sm:$0xff]
    %v1726 = vld [vmem:[%s5 + $0x28] sm:$0xff]
    %v1727 = vld [vmem:[%s5 + $0x30] sm:$0xff]
    %v1728 = vld [vmem:[%s5 + $0x38] sm:$0xff]
    %v1729 = vld [vmem:[%s5 + $0x40] sm:$0xff]
    %v1730 = vld [vmem:[%s5 + $0x48] sm:$0xff]
    %v1731 = vld [vmem:[%s5 + $0x50] sm:$0xff]
    %v1732 = vld [vmem:[%s5 + $0x58] sm:$0xff]
    %v1733 = vld [vmem:[%s5 + $0x60] sm:$0xff]
    %v1734 = vld [vmem:[%s5 + $0x68] sm:$0xff]
    %v1735 = vld [vmem:[%s5 + $0x70] sm:$0xff]
    %v1736 = vld [vmem:[%s5 + $0x78] sm:$0xff]
    %v1737 = vld [vmem:[%s5 + $0x80] sm:$0xff]
    %v1738 = vld [vmem:[%s5 + $0x88] sm:$0xff]
    %v1739 = vld [vmem:[%s5 + $0x90] sm:$0xff]
    %v1740 = vld [vmem:[%s5 + $0x98] sm:$0xff]
    %v1741 = vld [vmem:[%s5 + $0xa0] sm:$0xff]
    %v1742 = vld [vmem:[%s5 + $0xa8] sm:$0xff]
    %v1743 = vld [vmem:[%s5 + $0xb0] sm:$0xff]
    %v1744 = vld [vmem:[%s5 + $0xb8] sm:$0xff]
    %v1745 = vld [vmem:[%s5 + $0xc0] sm:$0xff]
    %v1746 = vld [vmem:[%s5 + $0xc8] sm:$0xff]
    %v1747 = vld [vmem:[%s5 + $0xd0] sm:$0xff]
    %v1748 = vld [vmem:[%s5 + $0xd8] sm:$0xff]
    %v1749 = vld [vmem:[%s5 + $0xe0] sm:$0xff]
    %v1750 = vld [vmem:[%s5 + $0xe8] sm:$0xff]
    %v1751 = vld [vmem:[%s5 + $0xf0] sm:$0xff]
    %v1752 = vld [vmem:[%s5 + $0xf8] sm:$0xff]
    %v1753 = vld [vmem:[%s5 + $0x100] sm:$0xff]
    %v1754 = vld [vmem:[%s5 + $0x108] sm:$0xff]
    %v1755 = vld [vmem:[%s5 + $0x110] sm:$0xff]
    %v1756 = vld [vmem:[%s5 + $0x118] sm:$0xff]
    %v1757 = vld [vmem:[%s5 + $0x120] sm:$0xff]
    %v1758 = vld [vmem:[%s5 + $0x128] sm:$0xff]
    %v1759 = vld [vmem:[%s5 + $0x130] sm:$0xff]
    %v1760 = vld [vmem:[%s5 + $0x138] sm:$0xff]
    %v1761 = vld [vmem:[%s5 + $0x140] sm:$0xff]
    %v1762 = vld [vmem:[%s5 + $0x148] sm:$0xff]
    %v1763 = vld [vmem:[%s5 + $0x150] sm:$0xff]
    %v1764 = vld [vmem:[%s5 + $0x158] sm:$0xff]
    %v1765 = vld [vmem:[%s5 + $0x160] sm:$0xff]
    %v1766 = vld [vmem:[%s5 + $0x168] sm:$0xff]
    %v1767 = vld [vmem:[%s5 + $0x170] sm:$0xff]
    %v1768 = vld [vmem:[%s5 + $0x178] sm:$0xff]
    %v1769 = vld [vmem:[%s5 + $0x180] sm:$0xff]
    %v1770 = vld [vmem:[%s5 + $0x188] sm:$0xff]
    %v1771 = vld [vmem:[%s5 + $0x190] sm:$0xff]
    %v1772 = vld [vmem:[%s5 + $0x198] sm:$0xff]
    %v1773 = vld [vmem:[%s5 + $0x1a0] sm:$0xff]
    %v1774 = vld [vmem:[%s5 + $0x1a8] sm:$0xff]
    %v1775 = vld [vmem:[%s5 + $0x1b0] sm:$0xff]
    %v1776 = vld [vmem:[%s5 + $0x1b8] sm:$0xff]
    %v1777 = vld [vmem:[%s5 + $0x1c0] sm:$0xff]
    %v1778 = vld [vmem:[%s5 + $0x1c8] sm:$0xff]
    %v1779 = vld [vmem:[%s5 + $0x1d0] sm:$0xff]
    %v1780 = vld [vmem:[%s5 + $0x1d8] sm:$0xff]
    %v1781 = vld [vmem:[%s5 + $0x1e0] sm:$0xff]
    %v1782 = vld [vmem:[%s5 + $0x1e8] sm:$0xff]
    %v1783 = vld [vmem:[%s5 + $0x1f0] sm:$0xff]
    %v1784 = vld [vmem:[%s5 + $0x1f8] sm:$0xff]
    %v1785 = vld [vmem:[%s6] sm:$0x3]
    %v1787 = vlaneseq
    %v1788 = vshrl.u32 %v1787, 7
    %v1789 = vsub.s32 0, %v1788
    %v1790 = vrot.slane %v1785, %v1789
    %v1791 = vlaneseq
    %v1792 = vshrl.u32 %v1791, 7
    %v1793 = vsub.s32 1, %v1792
    %v1794 = vrot.slane %v1785, %v1793
    %v1861 = vunpack.c.l.b16 %v1721
    %v1862 = vunpack.c.h.b16 %v1721
    %v1863 = vunpack.c.l.b16 %v1722
    %v1864 = vunpack.c.h.b16 %v1722
    %v1865 = vunpack.c.l.b16 %v1723
    %v1866 = vunpack.c.h.b16 %v1723
    %v1867 = vunpack.c.l.b16 %v1724
    %v1868 = vunpack.c.h.b16 %v1724
    %v1869 = vunpack.c.l.b16 %v1725
    %v1870 = vunpack.c.h.b16 %v1725
    %v1871 = vunpack.c.l.b16 %v1726
    %v1872 = vunpack.c.h.b16 %v1726
    %v1873 = vunpack.c.l.b16 %v1727
    %v1874 = vunpack.c.h.b16 %v1727
    %v1875 = vunpack.c.l.b16 %v1728
    %v1876 = vunpack.c.h.b16 %v1728
    %v1877 = vunpack.c.l.b16 %v1729
    %v1878 = vunpack.c.h.b16 %v1729
    %v1879 = vunpack.c.l.b16 %v1730
    %v1880 = vunpack.c.h.b16 %v1730
    %v1881 = vunpack.c.l.b16 %v1731
    %v1882 = vunpack.c.h.b16 %v1731
    %v1883 = vunpack.c.l.b16 %v1732
    %v1884 = vunpack.c.h.b16 %v1732
    %v1885 = vunpack.c.l.b16 %v1733
    %v1886 = vunpack.c.h.b16 %v1733
    %v1887 = vunpack.c.l.b16 %v1734
    %v1888 = vunpack.c.h.b16 %v1734
    %v1889 = vunpack.c.l.b16 %v1735
    %v1890 = vunpack.c.h.b16 %v1735
    %v1891 = vunpack.c.l.b16 %v1736
    %v1892 = vunpack.c.h.b16 %v1736
    %v1893 = vunpack.c.l.b16 %v1737
    %v1894 = vunpack.c.h.b16 %v1737
    %v1895 = vunpack.c.l.b16 %v1738
    %v1896 = vunpack.c.h.b16 %v1738
    %v1897 = vunpack.c.l.b16 %v1739
    %v1898 = vunpack.c.h.b16 %v1739
    %v1899 = vunpack.c.l.b16 %v1740
    %v1900 = vunpack.c.h.b16 %v1740
    %v1901 = vunpack.c.l.b16 %v1741
    %v1902 = vunpack.c.h.b16 %v1741
    %v1903 = vunpack.c.l.b16 %v1742
    %v1904 = vunpack.c.h.b16 %v1742
    %v1905 = vunpack.c.l.b16 %v1743
    %v1906 = vunpack.c.h.b16 %v1743
    %v1907 = vunpack.c.l.b16 %v1744
    %v1908 = vunpack.c.h.b16 %v1744
    %v1909 = vunpack.c.l.b16 %v1745
    %v1910 = vunpack.c.h.b16 %v1745
    %v1911 = vunpack.c.l.b16 %v1746
    %v1912 = vunpack.c.h.b16 %v1746
    %v1913 = vunpack.c.l.b16 %v1747
    %v1914 = vunpack.c.h.b16 %v1747
    %v1915 = vunpack.c.l.b16 %v1748
    %v1916 = vunpack.c.h.b16 %v1748
    %v1917 = vunpack.c.l.b16 %v1749
    %v1918 = vunpack.c.h.b16 %v1749
    %v1919 = vunpack.c.l.b16 %v1750
    %v1920 = vunpack.c.h.b16 %v1750
    %v1921 = vunpack.c.l.b16 %v1751
    %v1922 = vunpack.c.h.b16 %v1751
    %v1923 = vunpack.c.l.b16 %v1752
    %v1924 = vunpack.c.h.b16 %v1752
    %v1925 = vunpack.c.l.b16 %v1753
    %v1926 = vunpack.c.h.b16 %v1753
    %v1927 = vunpack.c.l.b16 %v1754
    %v1928 = vunpack.c.h.b16 %v1754
    %v1929 = vunpack.c.l.b16 %v1755
    %v1930 = vunpack.c.h.b16 %v1755
    %v1931 = vunpack.c.l.b16 %v1756
    %v1932 = vunpack.c.h.b16 %v1756
    %v1933 = vunpack.c.l.b16 %v1757
    %v1934 = vunpack.c.h.b16 %v1757
    %v1935 = vunpack.c.l.b16 %v1758
    %v1936 = vunpack.c.h.b16 %v1758
    %v1937 = vunpack.c.l.b16 %v1759
    %v1938 = vunpack.c.h.b16 %v1759
    %v1939 = vunpack.c.l.b16 %v1760
    %v1940 = vunpack.c.h.b16 %v1760
    %v1941 = vunpack.c.l.b16 %v1761
    %v1942 = vunpack.c.h.b16 %v1761
    %v1943 = vunpack.c.l.b16 %v1762
    %v1944 = vunpack.c.h.b16 %v1762
    %v1945 = vunpack.c.l.b16 %v1763
    %v1946 = vunpack.c.h.b16 %v1763
    %v1947 = vunpack.c.l.b16 %v1764
    %v1948 = vunpack.c.h.b16 %v1764
    %v1949 = vunpack.c.l.b16 %v1765
    %v1950 = vunpack.c.h.b16 %v1765
    %v1951 = vunpack.c.l.b16 %v1766
    %v1952 = vunpack.c.h.b16 %v1766
    %v1953 = vunpack.c.l.b16 %v1767
    %v1954 = vunpack.c.h.b16 %v1767
    %v1955 = vunpack.c.l.b16 %v1768
    %v1956 = vunpack.c.h.b16 %v1768
    %v1957 = vunpack.c.l.b16 %v1769
    %v1958 = vunpack.c.h.b16 %v1769
    %v1959 = vunpack.c.l.b16 %v1770
    %v1960 = vunpack.c.h.b16 %v1770
    %v1961 = vunpack.c.l.b16 %v1771
    %v1962 = vunpack.c.h.b16 %v1771
    %v1963 = vunpack.c.l.b16 %v1772
    %v1964 = vunpack.c.h.b16 %v1772
    %v1965 = vunpack.c.l.b16 %v1773
    %v1966 = vunpack.c.h.b16 %v1773
    %v1967 = vunpack.c.l.b16 %v1774
    %v1968 = vunpack.c.h.b16 %v1774
    %v1969 = vunpack.c.l.b16 %v1775
    %v1970 = vunpack.c.h.b16 %v1775
    %v1971 = vunpack.c.l.b16 %v1776
    %v1972 = vunpack.c.h.b16 %v1776
    %v1973 = vunpack.c.l.b16 %v1777
    %v1974 = vunpack.c.h.b16 %v1777
    %v1975 = vunpack.c.l.b16 %v1778
    %v1976 = vunpack.c.h.b16 %v1778
    %v1977 = vunpack.c.l.b16 %v1779
    %v1978 = vunpack.c.h.b16 %v1779
    %v1979 = vunpack.c.l.b16 %v1780
    %v1980 = vunpack.c.h.b16 %v1780
    %v1981 = vunpack.c.l.b16 %v1781
    %v1982 = vunpack.c.h.b16 %v1781
    %v1983 = vunpack.c.l.b16 %v1782
    %v1984 = vunpack.c.h.b16 %v1782
    %v1985 = vunpack.c.l.b16 %v1783
    %v1986 = vunpack.c.h.b16 %v1783
    %v1987 = vunpack.c.l.b16 %v1784
    %v1988 = vunpack.c.h.b16 %v1784
    %v1989 = vpack.c.b16 %v1863, %v1861
    %v1990 = vpack.c.b16 %v1864, %v1862
    %v1991 = vpack.c.b16 %v1867, %v1865
    %v1992 = vpack.c.b16 %v1868, %v1866
    %v1993 = vpack.c.b16 %v1871, %v1869
    %v1994 = vpack.c.b16 %v1872, %v1870
    %v1995 = vpack.c.b16 %v1875, %v1873
    %v1996 = vpack.c.b16 %v1876, %v1874
    %v1997 = vpack.c.b16 %v1879, %v1877
    %v1998 = vpack.c.b16 %v1880, %v1878
    %v1999 = vpack.c.b16 %v1883, %v1881
    %v2000 = vpack.c.b16 %v1884, %v1882
    %v2001 = vpack.c.b16 %v1887, %v1885
    %v2002 = vpack.c.b16 %v1888, %v1886
    %v2003 = vpack.c.b16 %v1891, %v1889
    %v2004 = vpack.c.b16 %v1892, %v1890
    %v2005 = vpack.c.b16 %v1895, %v1893
    %v2006 = vpack.c.b16 %v1896, %v1894
    %v2007 = vpack.c.b16 %v1899, %v1897
    %v2008 = vpack.c.b16 %v1900, %v1898
    %v2009 = vpack.c.b16 %v1903, %v1901
    %v2010 = vpack.c.b16 %v1904, %v1902
    %v2011 = vpack.c.b16 %v1907, %v1905
    %v2012 = vpack.c.b16 %v1908, %v1906
    %v2013 = vpack.c.b16 %v1911, %v1909
    %v2014 = vpack.c.b16 %v1912, %v1910
    %v2015 = vpack.c.b16 %v1915, %v1913
    %v2016 = vpack.c.b16 %v1916, %v1914
    %v2017 = vpack.c.b16 %v1919, %v1917
    %v2018 = vpack.c.b16 %v1920, %v1918
    %v2019 = vpack.c.b16 %v1923, %v1921
    %v2020 = vpack.c.b16 %v1924, %v1922
    %v2021 = vpack.c.b16 %v1927, %v1925
    %v2022 = vpack.c.b16 %v1928, %v1926
    %v2023 = vpack.c.b16 %v1931, %v1929
    %v2024 = vpack.c.b16 %v1932, %v1930
    %v2025 = vpack.c.b16 %v1935, %v1933
    %v2026 = vpack.c.b16 %v1936, %v1934
    %v2027 = vpack.c.b16 %v1939, %v1937
    %v2028 = vpack.c.b16 %v1940, %v1938
    %v2029 = vpack.c.b16 %v1943, %v1941
    %v2030 = vpack.c.b16 %v1944, %v1942
    %v2031 = vpack.c.b16 %v1947, %v1945
    %v2032 = vpack.c.b16 %v1948, %v1946
    %v2033 = vpack.c.b16 %v1951, %v1949
    %v2034 = vpack.c.b16 %v1952, %v1950
    %v2035 = vpack.c.b16 %v1955, %v1953
    %v2036 = vpack.c.b16 %v1956, %v1954
    %v2037 = vpack.c.b16 %v1959, %v1957
    %v2038 = vpack.c.b16 %v1960, %v1958
    %v2039 = vpack.c.b16 %v1963, %v1961
    %v2040 = vpack.c.b16 %v1964, %v1962
    %v2041 = vpack.c.b16 %v1967, %v1965
    %v2042 = vpack.c.b16 %v1968, %v1966
    %v2043 = vpack.c.b16 %v1971, %v1969
    %v2044 = vpack.c.b16 %v1972, %v1970
    %v2045 = vpack.c.b16 %v1975, %v1973
    %v2046 = vpack.c.b16 %v1976, %v1974
    %v2047 = vpack.c.b16 %v1979, %v1977
    %v2048 = vpack.c.b16 %v1980, %v1978
    %v2049 = vpack.c.b16 %v1983, %v1981
    %v2050 = vpack.c.b16 %v1984, %v1982
    %v2051 = vpack.c.b16 %v1987, %v1985
    %v2052 = vpack.c.b16 %v1988, %v1986
    %2117 = vmatprep.subr.bf16.mxu0 %v1990
    %2118 = vmatpush1.bf16.msra.mxu0 %v1989
    %2119 = vmatprep.subr.bf16.mxu0 %v1992
    %2120 = vmatpush1.bf16.msra.mxu0 %v1991
    %2121 = vmatprep.subr.bf16.mxu0 %v1994
    %2122 = vmatpush1.bf16.msra.mxu0 %v1993
    %2123 = vmatprep.subr.bf16.mxu0 %v1996
    %2124 = vmatpush1.bf16.msra.mxu0 %v1995
    %2125 = vmatprep.subr.bf16.mxu0 %v1998
    %2126 = vmatpush1.bf16.msra.mxu0 %v1997
    %2127 = vmatprep.subr.bf16.mxu0 %v2000
    %2128 = vmatpush1.bf16.msra.mxu0 %v1999
    %2129 = vmatprep.subr.bf16.mxu0 %v2002
    %2130 = vmatpush1.bf16.msra.mxu0 %v2001
    %2131 = vmatprep.subr.bf16.mxu0 %v2004
    %2132 = vmatpush1.bf16.msra.mxu0 %v2003
    %2133 = vmatprep.subr.bf16.mxu0 %v2006
    %2134 = vmatpush1.bf16.msra.mxu0 %v2005
    %2135 = vmatprep.subr.bf16.mxu0 %v2008
    %2136 = vmatpush1.bf16.msra.mxu0 %v2007
    %2137 = vmatprep.subr.bf16.mxu0 %v2010
    %2138 = vmatpush1.bf16.msra.mxu0 %v2009
    %2139 = vmatprep.subr.bf16.mxu0 %v2012
    %2140 = vmatpush1.bf16.msra.mxu0 %v2011
    %2141 = vmatprep.subr.bf16.mxu0 %v2014
    %2142 = vmatpush1.bf16.msra.mxu0 %v2013
    %2143 = vmatprep.subr.bf16.mxu0 %v2016
    %2144 = vmatpush1.bf16.msra.mxu0 %v2015
    %2145 = vmatprep.subr.bf16.mxu0 %v2018
    %2146 = vmatpush1.bf16.msra.mxu0 %v2017
    %2147 = vmatprep.subr.bf16.mxu0 %v2020
    %2148 = vmatpush1.bf16.msra.mxu0 %v2019
    %2149 = vmatprep.mubr.bf16.mxu0 %v1718
    %2150 = vmatmul.mubr.bf16.gmra.mrb[0].mxu0 %v1717
    %v2151 = vpop.f32.mrb[0].mxu0
    %v2152 = vadd.f32 %v1790, %v2151
    %v2153 = vpop.f32.mrb[0].mxu0
    %v2154 = vadd.f32 %v1794, %v2153
    %v2155 = vpop.f32.mrb[0].mxu0
    %v2156 = vpop.f32.mrb[0].mxu0
    %2157 = vdwg.mxu0
    %2158 = vmatprep.subr.bf16.mxu0 %v2022
    %2159 = vmatpush1.bf16.msra.mxu0 %v2021
    %2160 = vmatprep.subr.bf16.mxu0 %v2024
    %2161 = vmatpush1.bf16.msra.mxu0 %v2023
    %2162 = vmatprep.subr.bf16.mxu0 %v2026
    %2163 = vmatpush1.bf16.msra.mxu0 %v2025
    %2164 = vmatprep.subr.bf16.mxu0 %v2028
    %2165 = vmatpush1.bf16.msra.mxu0 %v2027
    %2166 = vmatprep.subr.bf16.mxu0 %v2030
    %2167 = vmatpush1.bf16.msra.mxu0 %v2029
    %2168 = vmatprep.subr.bf16.mxu0 %v2032
    %2169 = vmatpush1.bf16.msra.mxu0 %v2031
    %2170 = vmatprep.subr.bf16.mxu0 %v2034
    %2171 = vmatpush1.bf16.msra.mxu0 %v2033
    %2172 = vmatprep.subr.bf16.mxu0 %v2036
    %2173 = vmatpush1.bf16.msra.mxu0 %v2035
    %2174 = vmatprep.subr.bf16.mxu0 %v2038
    %2175 = vmatpush1.bf16.msra.mxu0 %v2037
    %2176 = vmatprep.subr.bf16.mxu0 %v2040
    %2177 = vmatpush1.bf16.msra.mxu0 %v2039
    %2178 = vmatprep.subr.bf16.mxu0 %v2042
    %2179 = vmatpush1.bf16.msra.mxu0 %v2041
    %2180 = vmatprep.subr.bf16.mxu0 %v2044
    %2181 = vmatpush1.bf16.msra.mxu0 %v2043
    %2182 = vmatprep.subr.bf16.mxu0 %v2046
    %2183 = vmatpush1.bf16.msra.mxu0 %v2045
    %2184 = vmatprep.subr.bf16.mxu0 %v2048
    %2185 = vmatpush1.bf16.msra.mxu0 %v2047
    %2186 = vmatprep.subr.bf16.mxu0 %v2050
    %2187 = vmatpush1.bf16.msra.mxu0 %v2049
    %2188 = vmatprep.subr.bf16.mxu0 %v2052
    %2189 = vmatpush1.bf16.msra.mxu0 %v2051
    %2190 = vmatprep.mubr.bf16.mxu0 %v1720
    %2191 = vmatmul.mubr.bf16.gmra.mrb[0].mxu0 %v1719
    %v2192 = vpop.f32.mrb[0].mxu0
    %v2193 = vadd.f32 %v2152, %v2192
    %v2194 = vpop.f32.mrb[0].mxu0
    %v2195 = vadd.f32 %v2154, %v2194
    %v2196 = vpop.f32.mrb[0].mxu0
    %v2197 = vpop.f32.mrb[0].mxu0
    %2198 = vdwg.mxu0
    %vm2199 = vcmp.gt.f32.partialorder %v2193, 0.0
    %vm2200 = vcmp.gt.f32.partialorder %v2195, 0.0
    %v2201 = vmul.f32 %v2193, 0.2
    %v2202 = vmul.f32 %v2195, 0.2
    %v2203 = vsel %vm2199, %v2193, %v2201
    %v2204 = vsel %vm2200, %v2195, %v2202
    %v2205 = vld [vmem:[%s7] sm:$0x3]
    %v2206 = vunpack.c.l.bf16 %v2205
    %v2208 = vlaneseq
    %v2209 = vshrl.u32 %v2208, 7
    %v2210 = vsub.s32 0, %v2209
    %v2211 = vrot.slane %v2206, %v2210
    %v2212 = vlaneseq
    %v2213 = vshrl.u32 %v2212, 7
    %v2214 = vsub.s32 2, %v2213
    %v2215 = vrot.slane %v2206, %v2214
    %v2218 = vlaneseq
    %v2219 = vshrl.u32 %v2218, 7
    %v2220 = vsub.s32 0, %v2219
    %v2221 = vrot.slane %v2211, %v2220
    %v2222 = vlaneseq
    %v2223 = vshrl.u32 %v2222, 7
    %v2224 = vsub.s32 0, %v2223
    %v2225 = vrot.slane %v2215, %v2224
    %v2226 = vmul.f32 %v2203, %v2221
    %v2227 = vmul.f32 %v2204, %v2225
    %v2228 = vadd.f32 %v2226, %v2227
    %2229 = vadd.xlane.f32.xlu0 %v2228
    %v2230 = vpop.xlane.xlu0 %2229
    %v2231 = vld [vmem:[#allocation2] sm:$0x1]
    %v2233 = vlaneseq
    %v2234 = vshrl.u32 %v2233, 7
    %v2235 = vsub.s32 0, %v2234
    %v2236 = vrot.slane %v2231, %v2235
    %v2238 = vadd.f32 %v2230, %v2236
    %v2239 = vxor.u32 %v2238, 2147483648
    %v2240 = vmul.f32 %v2239, 1.442695
    %v2241 = vpow.pop %v2240
    %v2242 = vadd.f32 %v2241, 1.0
    %v2243 = vrcp.pop %v2242
    %v2244 = vmul.f32 1.0, %v2243
    %2246 = vset.pattern.permute.xlu0 0
    %2247 = vperm.xlu0 %2246, %v2244
    %v2248 = vpop.permute.xlu0 %2247
    %2250 = vst [vmem:[#allocation3] sm:$0xff] %v2248
    // Predicated region
    $region38: #{stage1_discriminator_forward.1} parent=1 // pred_check
      _
    $region39: #{stage1_discriminator_forward.1} parent=1 // pred_check_branch
      %2252 = sbr.rel (0) target = $region41
    $region40: #{stage1_discriminator_forward.1} parent=1 // pred_region
      // Predicated region
      $region42: #{stage1_discriminator_forward.1} parent=40 // pred_check
        _
      $region43: #{stage1_discriminator_forward.1} parent=40 // pred_check_branch
        %2254 = sbr.rel (0) target = $region45
      $region44: #{stage1_discriminator_forward.1} parent=40 // pred_region
        // Predicated region
        $region46: #{stage1_discriminator_forward.1} parent=44 // pred_check
          _
        $region47: #{stage1_discriminator_forward.1} parent=44 // pred_check_branch
          %2256 = sbr.rel target = $region49
        $region48: #{stage1_discriminator_forward.1} parent=44 // pred_region
          // Predicated region
          $region61: #{stage1_discriminator_forward.1} parent=48 // pred_check
            _
          $region62: #{stage1_discriminator_forward.1} parent=48 // pred_check_branch
            %2271 = sbr.rel (0) target = $region64
          $region63: #{stage1_discriminator_forward.1} parent=48 // pred_region
            loop: start=0, step=1, limit=1
            $region65: #{stage1_discriminator_forward.1} parent=63 // loop_pre_header
              _
            $region66: #{stage1_discriminator_forward.1} parent=63 // loop_header
              %s2274 = sphi 0, %s2278
              %p2275 = scmp.ge.s32.totalorder %s2274, 1
              %s2279 = sphi [#allocation3], [#allocation3]
              %s2280 = sphi %s9, %s9
            $region67: #{stage1_discriminator_forward.1} parent=63 // loop_header_branch
              %2277 = sbr.rel (%p2275) target = $region71
            $region68: #{stage1_discriminator_forward.1} parent=63 // loop_body
              %v2281 = vld [vmem:[%s2279] sm:$0x3]
              %2282 = vst [vmem:[%s2280] sm:$0x3] %v2281
            $region69: #{stage1_discriminator_forward.1} parent=63 // loop_footer
              %s2278 = sadd.s32 1, %s2274
            $region70: #{stage1_discriminator_forward.1} parent=63 // loop_footer_branch
              %2273 = sbr.rel target = $region66
            $region71: #{stage1_discriminator_forward.1} parent=63 // loop_exit
              _
          $region64: #{stage1_discriminator_forward.1} parent=48 // pred_fallthru
            _
        $region49: #{stage1_discriminator_forward.1} parent=44 // pred_fallthru
          _
        // Predicated region
        $region50: #{stage1_discriminator_forward.1} parent=44 // pred_check
          _
        $region51: #{stage1_discriminator_forward.1} parent=44 // pred_check_branch
          %2258 = sbr.rel (0) target = $region53
        $region52: #{stage1_discriminator_forward.1} parent=44 // pred_region
          loop: start=0, step=1, limit=1
          $region54: #{stage1_discriminator_forward.1} parent=52 // loop_pre_header
            _
          $region55: #{stage1_discriminator_forward.1} parent=52 // loop_header
            %s2261 = sphi 0, %s2265
            %p2262 = scmp.ge.s32.totalorder %s2261, 1
            %s2266 = sphi [#allocation3], [#allocation3]
            %s2267 = sphi %s9, %s9
          $region56: #{stage1_discriminator_forward.1} parent=52 // loop_header_branch
            %2264 = sbr.rel (%p2262) target = $region60
          $region57: #{stage1_discriminator_forward.1} parent=52 // loop_body
            %v2268 = vld [vmem:[%s2266] sm:$0x3]
            %2269 = vst [vmem:[%s2267] sm:$0x3] %v2268
          $region58: #{stage1_discriminator_forward.1} parent=52 // loop_footer
            %s2265 = sadd.s32 1, %s2261
          $region59: #{stage1_discriminator_forward.1} parent=52 // loop_footer_branch
            %2260 = sbr.rel target = $region55
          $region60: #{stage1_discriminator_forward.1} parent=52 // loop_exit
            _
        $region53: #{stage1_discriminator_forward.1} parent=44 // pred_fallthru
          _
      $region45: #{stage1_discriminator_forward.1} parent=40 // pred_fallthru
        _
      %2283 = vnop
    $region41: #{stage1_discriminator_forward.1} parent=1 // pred_fallthru
      _
    // Predicated region
    $region72: #{stage1_discriminator_forward.1} parent=1 // pred_check
      _
    $region73: #{stage1_discriminator_forward.1} parent=1 // pred_check_branch
      %2285 = sbr.rel (0) target = $region75
    $region74: #{stage1_discriminator_forward.1} parent=1 // pred_region
      _
    $region75: #{stage1_discriminator_forward.1} parent=1 // pred_fallthru
      _

</llo_original>
